<compile_context>
chip_gen: v6e
topology: v6e:2x2x1
jax: 0.10.0
libtpu: 0.0.40
codegen_flags: <defaults>
</compile_context>

<pallas_src>
from functools import partial

import jax
import jax.numpy as jnp
from jax.experimental import pallas as pl
from jax.experimental.pallas import tpu as pltpu

EPS = 1e-5  # PyTorch nn.LayerNorm default


def _layernorm(x, gamma, beta):
    mean = jnp.mean(x, axis=-1, keepdims=True)
    var = jnp.mean((x - mean) ** 2, axis=-1, keepdims=True)
    return (x - mean) * jax.lax.rsqrt(var + EPS) * gamma + beta


def _gelu_exact(x):
    # PyTorch nn.GELU default = exact erf formulation
    return 0.5 * x * (1.0 + jax.lax.erf(x / jnp.sqrt(2.0).astype(x.dtype)))


def block_kernel(x_ref, ln1_g, ln1_b, wq_t, wk_t, wv_t, wproj_t, bproj,
                 ln2_g, ln2_b, w1_t, b1, w2_t, b2, o_ref,
                 *, num_heads, n_valid, compute_dtype):
    bb, Np, C = x_ref.shape                    # (block_b, padded tokens, channels)
    hd = C // num_heads
    cd = compute_dtype
    M = bb * Np

    # Flatten batch-block into the sublane (M) axis -> bigger matmul M for the MXU.
    x = x_ref[...].astype(jnp.float32).reshape(M, C)

    # ---------------- Attention branch ----------------
    xn = _layernorm(x, ln1_g[...], ln1_b[...]).astype(cd)
    # Weights are pre-transposed in the wrapper; attention scale is folded into WqT.
    # Cast q/k/v to the compute dtype once (half the live footprint in the head loop).
    q = jnp.dot(xn, wq_t[...], preferred_element_type=jnp.float32).astype(cd)   # (M, C)
    k = jnp.dot(xn, wk_t[...], preferred_element_type=jnp.float32).astype(cd)
    v = jnp.dot(xn, wv_t[...], preferred_element_type=jnp.float32).astype(cd)

    if n_valid < Np:                           # mask padded keys (static condition)
        key_ids = jax.lax.broadcasted_iota(jnp.int32, (Np, Np), 1)
        key_mask = key_ids < n_valid
    else:
        key_mask = None

    approx_recip = jnp.dtype(cd) != jnp.dtype(jnp.float32)

    # Per-head attention; head outputs are concatenated lane-dense so the output
    # projection is a single K=C matmul (full MXU contraction depth).
    head_rows = []
    for b in range(bb):                        # small static unroll
        r0 = b * Np
        head_cols = []
        for h in range(num_heads):
            c0 = h * hd
            qh = q[r0:r0 + Np, c0:c0 + hd]
            kh = k[r0:r0 + Np, c0:c0 + hd]
            vh = v[r0:r0 + Np, c0:c0 + hd]
            # q @ k^T without materializing a transpose.
            s = jax.lax.dot_general(qh, kh, (((1,), (1,)), ((), ())),
                                    preferred_element_type=jnp.float32)   # (Np, Np)
            if key_mask is not None:
                s = jnp.where(key_mask, s, jnp.float32(-1e30))
            s = s - jnp.max(s, axis=-1, keepdims=True)
            p = jnp.exp(s)
            inv = pl.reciprocal(jnp.sum(p, axis=-1, keepdims=True),
                                approx=approx_recip)
            # Normalize after PV: N*hd multiplies instead of N*N.
            ho = jnp.dot(p.astype(cd), vh, preferred_element_type=jnp.float32) * inv
            head_cols.append(ho)
        head_rows.append(head_cols[0] if num_heads == 1
                         else jnp.concatenate(head_cols, axis=-1))
    heads = head_rows[0] if bb == 1 else jnp.concatenate(head_rows, axis=0)  # (M, C)

    attn_out = jnp.dot(heads.astype(cd), wproj_t[...],
                       preferred_element_type=jnp.float32) + bproj[...]
    x = x + attn_out

    # ---------------- MLP branch ----------------
    xn2 = _layernorm(x, ln2_g[...], ln2_b[...])
    h1 = jnp.dot(xn2.astype(cd), w1_t[...], preferred_element_type=jnp.float32) + b1[...]
    h1 = _gelu_exact(h1)
    h2 = jnp.dot(h1.astype(cd), w2_t[...], preferred_element_type=jnp.float32) + b2[...]
    x = x + h2

    o_ref[...] = x.reshape(bb, Np, C).astype(o_ref.dtype)


def vit_block(x, params, *, num_heads, block_b=1, compute_dtype=jnp.bfloat16):
    B, N, C = x.shape
    assert C % num_heads == 0 and B % block_b == 0
    hd = C // num_heads
    scale = hd ** -0.5
    hidden = params["w1"].shape[0]

    cd = compute_dtype
    cd_bytes = jnp.dtype(cd).itemsize
    # Np is only ever the sublane/M axis of the matmuls, so pad to the sublane
    # granularity (8 for f32, 16 for packed bf16), not 128.  Padded keys are masked
    # inside the kernel; padded rows are sliced off afterwards.
    pad_to = 8 if cd_bytes == 4 else 16
    N_pad = ((N + pad_to - 1) // pad_to) * pad_to
    x_p = jnp.pad(x, ((0, 0), (0, N_pad - N), (0, 0))) if N_pad != N else x

    f32 = jnp.float32
    wqkv = params["wqkv"].astype(f32)
    # Pre-transpose (free layout plumbing) + fold attention scale into WqT; compute-dtype
    # weights halve HBM traffic and VMEM footprint (important for real ViT sizes).
    wq_t = (wqkv[:C, :].T * scale).astype(cd)
    wk_t = wqkv[C:2 * C, :].T.astype(cd)
    wv_t = wqkv[2 * C:, :].T.astype(cd)
    wproj_t = params["wproj"].T.astype(cd)
    w1_t = params["w1"].T.astype(cd)
    w2_t = params["w2"].T.astype(cd)

    def const_spec(shape):
        # Constant index_map -> fetched once; single-buffer so the weight doesn't
        # occupy 2x its size in VMEM.
        return pl.BlockSpec(shape, lambda b: (0, 0), pipeline_mode=pl.Buffered(1))

    in_specs = [
        pl.BlockSpec((block_b, N_pad, C), lambda b: (b, 0, 0)),  # x (pipelined)
        const_spec((1, C)), const_spec((1, C)),                  # ln1 gamma/beta
        const_spec((C, C)), const_spec((C, C)), const_spec((C, C)),  # WqT, WkT, WvT
        const_spec((C, C)), const_spec((1, C)),                  # WprojT, bproj
        const_spec((1, C)), const_spec((1, C)),                  # ln2 gamma/beta
        const_spec((C, hidden)), const_spec((1, hidden)),        # W1T, b1
        const_spec((hidden, C)), const_spec((1, C)),             # W2T, b2
    ]

    # Explicit scoped-VMEM limit sized from the actual footprint: single-buffered
    # weights + double-buffered x/out blocks + in-kernel activation temporaries,
    # with headroom, capped at the smallest physical VMEM (v7x: 64 MiB / TC).
    w_bytes = (4 * C * C + 2 * C * hidden) * cd_bytes + 8 * C * 4 + hidden * 4
    xblk_bytes = 2 * 2 * block_b * N_pad * C * x.dtype.itemsize      # x + out, 2 bufs
    act_bytes = 12 * block_b * N_pad * max(C, hidden) * 4            # q/k/v/h1/... temps
    vmem_limit = int(min(64 * 1024 * 1024,
                         max(16 * 1024 * 1024,
                             w_bytes + xblk_bytes + act_bytes + (4 << 20))))

    kernel = partial(block_kernel, num_heads=num_heads, n_valid=N,
                     compute_dtype=cd)

    out = pl.pallas_call(
        kernel,
        out_shape=jax.ShapeDtypeStruct((B, N_pad, C), x.dtype),
        grid=(B // block_b,),
        in_specs=in_specs,
        out_specs=pl.BlockSpec((block_b, N_pad, C), lambda b: (b, 0, 0)),
        compiler_params=pltpu.CompilerParams(
            dimension_semantics=("parallel",),
            vmem_limit_bytes=vmem_limit),
    )(x_p,
      params["ln1_g"].astype(f32), params["ln1_b"].astype(f32),
      wq_t, wk_t, wv_t, wproj_t, params["bproj"].astype(f32),
      params["ln2_g"].astype(f32), params["ln2_b"].astype(f32),
      w1_t, params["b1"].astype(f32), w2_t, params["b2"].astype(f32))

    return out[:, :N, :] if N_pad != N else out


# ---------------- pure-JAX reference (for correctness check) ----------------
def vit_block_ref(x, params, *, num_heads):
    B, N, C = x.shape
    hd = C // num_heads
    scale = hd ** -0.5

    def ln(v, g, b):
        m = jnp.mean(v, axis=-1, keepdims=True)
        var = jnp.mean((v - m) ** 2, axis=-1, keepdims=True)
        return (v - m) * jax.lax.rsqrt(var + EPS) * g + b

    xn = ln(x, params["ln1_g"][0], params["ln1_b"][0])
    qkv = xn @ params["wqkv"].T                                   # (B, N, 3C)
    qkv = qkv.reshape(B, N, 3, num_heads, hd).transpose(2, 0, 3, 1, 4)
    q, k, v = qkv[0], qkv[1], qkv[2]                              # (B, H, N, hd)
    attn = jnp.einsum("bhnd,bhmd->bhnm", q, k) * scale
    attn = jax.nn.softmax(attn, axis=-1)
    o = jnp.einsum("bhnm,bhmd->bhnd", attn, v)                    # (B, H, N, hd)
    o = o.transpose(0, 2, 1, 3).reshape(B, N, C)
    o = o @ params["wproj"].T + params["bproj"][0]
    x = x + o

    xn2 = ln(x, params["ln2_g"][0], params["ln2_b"][0])
    h = xn2 @ params["w1"].T + params["b1"][0]
    h = 0.5 * h * (1.0 + jax.lax.erf(h / jnp.sqrt(2.0)))
    h = h @ params["w2"].T + params["b2"][0]
    return x + h


def init_params(key, dim, num_heads, mlp_ratio=4.0):
    hidden = int(dim * mlp_ratio)
    ks = jax.random.split(key, 8)
    return {
        "ln1_g": jnp.ones((1, dim), jnp.float32),
        "ln1_b": jnp.zeros((1, dim), jnp.float32),
        "wqkv": 0.02 * jax.random.normal(ks[0], (3 * dim, dim), jnp.float32),
        "wproj": 0.02 * jax.random.normal(ks[1], (dim, dim), jnp.float32),
        "bproj": 0.02 * jax.random.normal(ks[2], (1, dim), jnp.float32),
        "ln2_g": jnp.ones((1, dim), jnp.float32),
        "ln2_b": jnp.zeros((1, dim), jnp.float32),
        "w1": 0.02 * jax.random.normal(ks[3], (hidden, dim), jnp.float32),
        "b1": 0.02 * jax.random.normal(ks[4], (1, hidden), jnp.float32),
        "w2": 0.02 * jax.random.normal(ks[5], (dim, hidden), jnp.float32),
        "b2": 0.02 * jax.random.normal(ks[6], (1, dim), jnp.float32),
    }


if __name__ == "__main__":
    B, N, C = 2, 8, 32
    num_heads = 4

    key = jax.random.PRNGKey(0)
    kx, kp, kx2, kx3 = jax.random.split(key, 4)
    x = jax.random.normal(kx, (B, N, C), jnp.float32)
    params = init_params(kp, C, num_heads)

    ref = vit_block_ref(x, params, num_heads=num_heads)

    # 1) f32 MXU operands, one batch element per grid step (exact reciprocal path).
    out_f32 = jax.block_until_ready(
        vit_block(x, params, num_heads=num_heads, block_b=1,
                  compute_dtype=jnp.float32))
    assert out_f32.shape == (B, N, C)
    assert jnp.allclose(out_f32, ref, atol=2e-3, rtol=2e-3), "f32 path mismatch"

    # 2) bf16 MXU operands, two batch elements fused per grid step while still
    #    keeping >=2 grid steps (both v7x TensorCores active).  Also exercises the
    #    bf16 pad_to=16 key-mask path (N=8 -> N_pad=16).
    x_big = jax.random.normal(kx3, (4, N, C), jnp.float32)
    ref_big = vit_block_ref(x_big, params, num_heads=num_heads)
    out_bf16 = jax.block_until_ready(
        vit_block(x_big, params, num_heads=num_heads, block_b=2,
                  compute_dtype=jnp.bfloat16))
    assert out_bf16.shape == (4, N, C)
    assert jnp.allclose(out_bf16, ref_big, atol=3e-2, rtol=3e-2), "bf16 path mismatch"

    # 3) Non-multiple-of-8 token count exercises the padding + key-mask path in f32.
    x2 = jax.random.normal(kx2, (B, 11, C), jnp.float32)
    ref2 = vit_block_ref(x2, params, num_heads=num_heads)
    out2 = jax.block_until_ready(
        vit_block(x2, params, num_heads=num_heads, block_b=1,
                  compute_dtype=jnp.float32))
    assert out2.shape == (B, 11, C)
    assert jnp.allclose(out2, ref2, atol=2e-3, rtol=2e-3), "padded path mismatch"

    print("KERNEL_OK")
</pallas_src>

<mosaic_0001>
module attributes {stable_mosaic.version = 11 : i64} {
  func.func @block_kernel(%arg0: i32, %arg1: memref<1x8x32xf32, #tpu.memory_space<vmem>>, %arg2: memref<1x32xf32, #tpu.memory_space<vmem>>, %arg3: memref<1x32xf32, #tpu.memory_space<vmem>>, %arg4: memref<32x32xf32, #tpu.memory_space<vmem>>, %arg5: memref<32x32xf32, #tpu.memory_space<vmem>>, %arg6: memref<32x32xf32, #tpu.memory_space<vmem>>, %arg7: memref<32x32xf32, #tpu.memory_space<vmem>>, %arg8: memref<1x32xf32, #tpu.memory_space<vmem>>, %arg9: memref<1x32xf32, #tpu.memory_space<vmem>>, %arg10: memref<1x32xf32, #tpu.memory_space<vmem>>, %arg11: memref<32x128xf32, #tpu.memory_space<vmem>>, %arg12: memref<1x128xf32, #tpu.memory_space<vmem>>, %arg13: memref<128x32xf32, #tpu.memory_space<vmem>>, %arg14: memref<1x32xf32, #tpu.memory_space<vmem>>, %arg15: memref<1x8x32xf32, #tpu.memory_space<vmem>>) attributes {dimension_semantics = [#tpu.dimension_semantics<parallel>], iteration_bounds = array<i64: 2>, scalar_prefetch = 0 : i64, scratch_operands = 0 : i64, tpu.core_type = #tpu.core_type<tc>, window_params = [{transform_indices = @transform_0, window_bounds = array<i64: 1, 8, 32>}, {pipeline_mode = #tpu.pipeline_mode<synchronous>, transform_indices = @transform_1, window_bounds = array<i64: 1, 32>}, {pipeline_mode = #tpu.pipeline_mode<synchronous>, transform_indices = @transform_2, window_bounds = array<i64: 1, 32>}, {pipeline_mode = #tpu.pipeline_mode<synchronous>, transform_indices = @transform_3, window_bounds = array<i64: 32, 32>}, {pipeline_mode = #tpu.pipeline_mode<synchronous>, transform_indices = @transform_4, window_bounds = array<i64: 32, 32>}, {pipeline_mode = #tpu.pipeline_mode<synchronous>, transform_indices = @transform_5, window_bounds = array<i64: 32, 32>}, {pipeline_mode = #tpu.pipeline_mode<synchronous>, transform_indices = @transform_6, window_bounds = array<i64: 32, 32>}, {pipeline_mode = #tpu.pipeline_mode<synchronous>, transform_indices = @transform_7, window_bounds = array<i64: 1, 32>}, {pipeline_mode = #tpu.pipeline_mode<synchronous>, transform_indices = @transform_8, window_bounds = array<i64: 1, 32>}, {pipeline_mode = #tpu.pipeline_mode<synchronous>, transform_indices = @transform_9, window_bounds = array<i64: 1, 32>}, {pipeline_mode = #tpu.pipeline_mode<synchronous>, transform_indices = @transform_10, window_bounds = array<i64: 32, 128>}, {pipeline_mode = #tpu.pipeline_mode<synchronous>, transform_indices = @transform_11, window_bounds = array<i64: 1, 128>}, {pipeline_mode = #tpu.pipeline_mode<synchronous>, transform_indices = @transform_12, window_bounds = array<i64: 128, 32>}, {pipeline_mode = #tpu.pipeline_mode<synchronous>, transform_indices = @transform_13, window_bounds = array<i64: 1, 32>}, {transform_indices = @transform_14, window_bounds = array<i64: 1, 8, 32>}]} {
    %c0 = arith.constant 0 : index
    %c0_0 = arith.constant 0 : index
    %c0_1 = arith.constant 0 : index
    %0 = vector.load %arg1[%c0, %c0_0, %c0_1] : memref<1x8x32xf32, #tpu.memory_space<vmem>>, vector<1x8x32xf32>
    %1 = vector.shape_cast %0 : vector<1x8x32xf32> to vector<8x32xf32>
    %c0_2 = arith.constant 0 : index
    %c0_3 = arith.constant 0 : index
    %2 = vector.load %arg2[%c0_2, %c0_3] : memref<1x32xf32, #tpu.memory_space<vmem>>, vector<1x32xf32>
    %c0_4 = arith.constant 0 : index
    %c0_5 = arith.constant 0 : index
    %3 = vector.load %arg3[%c0_4, %c0_5] : memref<1x32xf32, #tpu.memory_space<vmem>>, vector<1x32xf32>
    %cst = arith.constant dense<0.000000e+00> : vector<8xf32>
    %4 = vector.multi_reduction <add>, %1, %cst [1] : vector<8x32xf32> to vector<8xf32>
    %5 = vector.shape_cast %4 : vector<8xf32> to vector<8x1xf32>
    %cst_6 = arith.constant 3.200000e+01 : f32
    %6 = vector.broadcast %cst_6 : f32 to vector<8x1xf32>
    %7 = arith.divf %5, %6 : vector<8x1xf32>
    %8 = vector.broadcast %7 : vector<8x1xf32> to vector<8x32xf32>
    %9 = arith.subf %1, %8 : vector<8x32xf32>
    %10 = arith.mulf %9, %9 : vector<8x32xf32>
    %cst_7 = arith.constant dense<0.000000e+00> : vector<8xf32>
    %11 = vector.multi_reduction <add>, %10, %cst_7 [1] : vector<8x32xf32> to vector<8xf32>
    %12 = vector.shape_cast %11 : vector<8xf32> to vector<8x1xf32>
    %cst_8 = arith.constant 3.200000e+01 : f32
    %13 = vector.broadcast %cst_8 : f32 to vector<8x1xf32>
    %14 = arith.divf %12, %13 : vector<8x1xf32>
    %15 = vector.broadcast %7 : vector<8x1xf32> to vector<8x32xf32>
    %16 = arith.subf %1, %15 : vector<8x32xf32>
    %cst_9 = arith.constant 9.99999974E-6 : f32
    %17 = vector.broadcast %cst_9 : f32 to vector<8x1xf32>
    %18 = arith.addf %14, %17 : vector<8x1xf32>
    %19 = math.rsqrt %18 : vector<8x1xf32>
    %20 = vector.broadcast %19 : vector<8x1xf32> to vector<8x32xf32>
    %21 = arith.mulf %16, %20 : vector<8x32xf32>
    %22 = vector.broadcast %2 : vector<1x32xf32> to vector<8x32xf32>
    %23 = arith.mulf %21, %22 : vector<8x32xf32>
    %24 = vector.broadcast %3 : vector<1x32xf32> to vector<8x32xf32>
    %25 = arith.addf %23, %24 : vector<8x32xf32>
    %c0_10 = arith.constant 0 : index
    %c0_11 = arith.constant 0 : index
    %26 = vector.load %arg4[%c0_10, %c0_11] : memref<32x32xf32, #tpu.memory_space<vmem>>, vector<32x32xf32>
    %cst_12 = arith.constant dense<0.000000e+00> : vector<8x32xf32>
    %27 = tpu.matmul %25, %26, %cst_12 {dimension_numbers = #tpu.dot_dimension_numbers<[1], [0], [0], [1], [0, 0, 1, 1], [], []>} : vector<8x32xf32>, vector<32x32xf32>, vector<8x32xf32> -> vector<8x32xf32>
    %c0_13 = arith.constant 0 : index
    %c0_14 = arith.constant 0 : index
    %28 = vector.load %arg5[%c0_13, %c0_14] : memref<32x32xf32, #tpu.memory_space<vmem>>, vector<32x32xf32>
    %cst_15 = arith.constant dense<0.000000e+00> : vector<8x32xf32>
    %29 = tpu.matmul %25, %28, %cst_15 {dimension_numbers = #tpu.dot_dimension_numbers<[1], [0], [0], [1], [0, 0, 1, 1], [], []>} : vector<8x32xf32>, vector<32x32xf32>, vector<8x32xf32> -> vector<8x32xf32>
    %c0_16 = arith.constant 0 : index
    %c0_17 = arith.constant 0 : index
    %30 = vector.load %arg6[%c0_16, %c0_17] : memref<32x32xf32, #tpu.memory_space<vmem>>, vector<32x32xf32>
    %cst_18 = arith.constant dense<0.000000e+00> : vector<8x32xf32>
    %31 = tpu.matmul %25, %30, %cst_18 {dimension_numbers = #tpu.dot_dimension_numbers<[1], [0], [0], [1], [0, 0, 1, 1], [], []>} : vector<8x32xf32>, vector<32x32xf32>, vector<8x32xf32> -> vector<8x32xf32>
    %32 = vector.extract_strided_slice %27 {offsets = [0, 0], sizes = [8, 8], strides = [1, 1]} : vector<8x32xf32> to vector<8x8xf32>
    %33 = vector.extract_strided_slice %29 {offsets = [0, 0], sizes = [8, 8], strides = [1, 1]} : vector<8x32xf32> to vector<8x8xf32>
    %34 = vector.extract_strided_slice %31 {offsets = [0, 0], sizes = [8, 8], strides = [1, 1]} : vector<8x32xf32> to vector<8x8xf32>
    %cst_19 = arith.constant dense<0.000000e+00> : vector<8x8xf32>
    %35 = tpu.matmul %32, %33, %cst_19 {dimension_numbers = #tpu.dot_dimension_numbers<[1], [1], [0], [0], [0, 0, 1, 0], [], []>} : vector<8x8xf32>, vector<8x8xf32>, vector<8x8xf32> -> vector<8x8xf32>
    %cst_20 = arith.constant dense<0xFF800000> : vector<8xf32>
    %36 = vector.multi_reduction <maximumf>, %35, %cst_20 [1] : vector<8x8xf32> to vector<8xf32>
    %37 = vector.shape_cast %36 : vector<8xf32> to vector<8x1xf32>
    %38 = vector.broadcast %37 : vector<8x1xf32> to vector<8x8xf32>
    %39 = arith.subf %35, %38 : vector<8x8xf32>
    %40 = math.exp %39 : vector<8x8xf32>
    %cst_21 = arith.constant dense<0.000000e+00> : vector<8xf32>
    %41 = vector.multi_reduction <add>, %40, %cst_21 [1] : vector<8x8xf32> to vector<8xf32>
    %42 = vector.shape_cast %41 : vector<8xf32> to vector<8x1xf32>
    %43 = tpu.reciprocal %42 : vector<8x1xf32> -> vector<8x1xf32>
    %cst_22 = arith.constant dense<0.000000e+00> : vector<8x8xf32>
    %44 = tpu.matmul %40, %34, %cst_22 {dimension_numbers = #tpu.dot_dimension_numbers<[1], [0], [0], [1], [0, 0, 1, 1], [], []>} : vector<8x8xf32>, vector<8x8xf32>, vector<8x8xf32> -> vector<8x8xf32>
    %45 = vector.broadcast %43 : vector<8x1xf32> to vector<8x8xf32>
    %46 = arith.mulf %44, %45 : vector<8x8xf32>
    %47 = vector.extract_strided_slice %27 {offsets = [0, 8], sizes = [8, 8], strides = [1, 1]} : vector<8x32xf32> to vector<8x8xf32>
    %48 = vector.extract_strided_slice %29 {offsets = [0, 8], sizes = [8, 8], strides = [1, 1]} : vector<8x32xf32> to vector<8x8xf32>
    %49 = vector.extract_strided_slice %31 {offsets = [0, 8], sizes = [8, 8], strides = [1, 1]} : vector<8x32xf32> to vector<8x8xf32>
    %cst_23 = arith.constant dense<0.000000e+00> : vector<8x8xf32>
    %50 = tpu.matmul %47, %48, %cst_23 {dimension_numbers = #tpu.dot_dimension_numbers<[1], [1], [0], [0], [0, 0, 1, 0], [], []>} : vector<8x8xf32>, vector<8x8xf32>, vector<8x8xf32> -> vector<8x8xf32>
    %cst_24 = arith.constant dense<0xFF800000> : vector<8xf32>
    %51 = vector.multi_reduction <maximumf>, %50, %cst_24 [1] : vector<8x8xf32> to vector<8xf32>
    %52 = vector.shape_cast %51 : vector<8xf32> to vector<8x1xf32>
    %53 = vector.broadcast %52 : vector<8x1xf32> to vector<8x8xf32>
    %54 = arith.subf %50, %53 : vector<8x8xf32>
    %55 = math.exp %54 : vector<8x8xf32>
    %cst_25 = arith.constant dense<0.000000e+00> : vector<8xf32>
    %56 = vector.multi_reduction <add>, %55, %cst_25 [1] : vector<8x8xf32> to vector<8xf32>
    %57 = vector.shape_cast %56 : vector<8xf32> to vector<8x1xf32>
    %58 = tpu.reciprocal %57 : vector<8x1xf32> -> vector<8x1xf32>
    %cst_26 = arith.constant dense<0.000000e+00> : vector<8x8xf32>
    %59 = tpu.matmul %55, %49, %cst_26 {dimension_numbers = #tpu.dot_dimension_numbers<[1], [0], [0], [1], [0, 0, 1, 1], [], []>} : vector<8x8xf32>, vector<8x8xf32>, vector<8x8xf32> -> vector<8x8xf32>
    %60 = vector.broadcast %58 : vector<8x1xf32> to vector<8x8xf32>
    %61 = arith.mulf %59, %60 : vector<8x8xf32>
    %62 = vector.extract_strided_slice %27 {offsets = [0, 16], sizes = [8, 8], strides = [1, 1]} : vector<8x32xf32> to vector<8x8xf32>
    %63 = vector.extract_strided_slice %29 {offsets = [0, 16], sizes = [8, 8], strides = [1, 1]} : vector<8x32xf32> to vector<8x8xf32>
    %64 = vector.extract_strided_slice %31 {offsets = [0, 16], sizes = [8, 8], strides = [1, 1]} : vector<8x32xf32> to vector<8x8xf32>
    %cst_27 = arith.constant dense<0.000000e+00> : vector<8x8xf32>
    %65 = tpu.matmul %62, %63, %cst_27 {dimension_numbers = #tpu.dot_dimension_numbers<[1], [1], [0], [0], [0, 0, 1, 0], [], []>} : vector<8x8xf32>, vector<8x8xf32>, vector<8x8xf32> -> vector<8x8xf32>
    %cst_28 = arith.constant dense<0xFF800000> : vector<8xf32>
    %66 = vector.multi_reduction <maximumf>, %65, %cst_28 [1] : vector<8x8xf32> to vector<8xf32>
    %67 = vector.shape_cast %66 : vector<8xf32> to vector<8x1xf32>
    %68 = vector.broadcast %67 : vector<8x1xf32> to vector<8x8xf32>
    %69 = arith.subf %65, %68 : vector<8x8xf32>
    %70 = math.exp %69 : vector<8x8xf32>
    %cst_29 = arith.constant dense<0.000000e+00> : vector<8xf32>
    %71 = vector.multi_reduction <add>, %70, %cst_29 [1] : vector<8x8xf32> to vector<8xf32>
    %72 = vector.shape_cast %71 : vector<8xf32> to vector<8x1xf32>
    %73 = tpu.reciprocal %72 : vector<8x1xf32> -> vector<8x1xf32>
    %cst_30 = arith.constant dense<0.000000e+00> : vector<8x8xf32>
    %74 = tpu.matmul %70, %64, %cst_30 {dimension_numbers = #tpu.dot_dimension_numbers<[1], [0], [0], [1], [0, 0, 1, 1], [], []>} : vector<8x8xf32>, vector<8x8xf32>, vector<8x8xf32> -> vector<8x8xf32>
    %75 = vector.broadcast %73 : vector<8x1xf32> to vector<8x8xf32>
    %76 = arith.mulf %74, %75 : vector<8x8xf32>
    %77 = vector.extract_strided_slice %27 {offsets = [0, 24], sizes = [8, 8], strides = [1, 1]} : vector<8x32xf32> to vector<8x8xf32>
    %78 = vector.extract_strided_slice %29 {offsets = [0, 24], sizes = [8, 8], strides = [1, 1]} : vector<8x32xf32> to vector<8x8xf32>
    %79 = vector.extract_strided_slice %31 {offsets = [0, 24], sizes = [8, 8], strides = [1, 1]} : vector<8x32xf32> to vector<8x8xf32>
    %cst_31 = arith.constant dense<0.000000e+00> : vector<8x8xf32>
    %80 = tpu.matmul %77, %78, %cst_31 {dimension_numbers = #tpu.dot_dimension_numbers<[1], [1], [0], [0], [0, 0, 1, 0], [], []>} : vector<8x8xf32>, vector<8x8xf32>, vector<8x8xf32> -> vector<8x8xf32>
    %cst_32 = arith.constant dense<0xFF800000> : vector<8xf32>
    %81 = vector.multi_reduction <maximumf>, %80, %cst_32 [1] : vector<8x8xf32> to vector<8xf32>
    %82 = vector.shape_cast %81 : vector<8xf32> to vector<8x1xf32>
    %83 = vector.broadcast %82 : vector<8x1xf32> to vector<8x8xf32>
    %84 = arith.subf %80, %83 : vector<8x8xf32>
    %85 = math.exp %84 : vector<8x8xf32>
    %cst_33 = arith.constant dense<0.000000e+00> : vector<8xf32>
    %86 = vector.multi_reduction <add>, %85, %cst_33 [1] : vector<8x8xf32> to vector<8xf32>
    %87 = vector.shape_cast %86 : vector<8xf32> to vector<8x1xf32>
    %88 = tpu.reciprocal %87 : vector<8x1xf32> -> vector<8x1xf32>
    %cst_34 = arith.constant dense<0.000000e+00> : vector<8x8xf32>
    %89 = tpu.matmul %85, %79, %cst_34 {dimension_numbers = #tpu.dot_dimension_numbers<[1], [0], [0], [1], [0, 0, 1, 1], [], []>} : vector<8x8xf32>, vector<8x8xf32>, vector<8x8xf32> -> vector<8x8xf32>
    %90 = vector.broadcast %88 : vector<8x1xf32> to vector<8x8xf32>
    %91 = arith.mulf %89, %90 : vector<8x8xf32>
    %92 = tpu.concatenate %46, %61, %76, %91 in 1 : vector<8x8xf32>, vector<8x8xf32>, vector<8x8xf32>, vector<8x8xf32> -> vector<8x32xf32>
    %c0_35 = arith.constant 0 : index
    %c0_36 = arith.constant 0 : index
    %93 = vector.load %arg7[%c0_35, %c0_36] : memref<32x32xf32, #tpu.memory_space<vmem>>, vector<32x32xf32>
    %cst_37 = arith.constant dense<0.000000e+00> : vector<8x32xf32>
    %94 = tpu.matmul %92, %93, %cst_37 {dimension_numbers = #tpu.dot_dimension_numbers<[1], [0], [0], [1], [0, 0, 1, 1], [], []>} : vector<8x32xf32>, vector<32x32xf32>, vector<8x32xf32> -> vector<8x32xf32>
    %c0_38 = arith.constant 0 : index
    %c0_39 = arith.constant 0 : index
    %95 = vector.load %arg8[%c0_38, %c0_39] : memref<1x32xf32, #tpu.memory_space<vmem>>, vector<1x32xf32>
    %96 = vector.broadcast %95 : vector<1x32xf32> to vector<8x32xf32>
    %97 = arith.addf %94, %96 : vector<8x32xf32>
    %98 = arith.addf %1, %97 : vector<8x32xf32>
    %c0_40 = arith.constant 0 : index
    %c0_41 = arith.constant 0 : index
    %99 = vector.load %arg9[%c0_40, %c0_41] : memref<1x32xf32, #tpu.memory_space<vmem>>, vector<1x32xf32>
    %c0_42 = arith.constant 0 : index
    %c0_43 = arith.constant 0 : index
    %100 = vector.load %arg10[%c0_42, %c0_43] : memref<1x32xf32, #tpu.memory_space<vmem>>, vector<1x32xf32>
    %cst_44 = arith.constant dense<0.000000e+00> : vector<8xf32>
    %101 = vector.multi_reduction <add>, %98, %cst_44 [1] : vector<8x32xf32> to vector<8xf32>
    %102 = vector.shape_cast %101 : vector<8xf32> to vector<8x1xf32>
    %cst_45 = arith.constant 3.200000e+01 : f32
    %103 = vector.broadcast %cst_45 : f32 to vector<8x1xf32>
    %104 = arith.divf %102, %103 : vector<8x1xf32>
    %105 = vector.broadcast %104 : vector<8x1xf32> to vector<8x32xf32>
    %106 = arith.subf %98, %105 : vector<8x32xf32>
    %107 = arith.mulf %106, %106 : vector<8x32xf32>
    %cst_46 = arith.constant dense<0.000000e+00> : vector<8xf32>
    %108 = vector.multi_reduction <add>, %107, %cst_46 [1] : vector<8x32xf32> to vector<8xf32>
    %109 = vector.shape_cast %108 : vector<8xf32> to vector<8x1xf32>
    %cst_47 = arith.constant 3.200000e+01 : f32
    %110 = vector.broadcast %cst_47 : f32 to vector<8x1xf32>
    %111 = arith.divf %109, %110 : vector<8x1xf32>
    %112 = vector.broadcast %104 : vector<8x1xf32> to vector<8x32xf32>
    %113 = arith.subf %98, %112 : vector<8x32xf32>
    %cst_48 = arith.constant 9.99999974E-6 : f32
    %114 = vector.broadcast %cst_48 : f32 to vector<8x1xf32>
    %115 = arith.addf %111, %114 : vector<8x1xf32>
    %116 = math.rsqrt %115 : vector<8x1xf32>
    %117 = vector.broadcast %116 : vector<8x1xf32> to vector<8x32xf32>
    %118 = arith.mulf %113, %117 : vector<8x32xf32>
    %119 = vector.broadcast %99 : vector<1x32xf32> to vector<8x32xf32>
    %120 = arith.mulf %118, %119 : vector<8x32xf32>
    %121 = vector.broadcast %100 : vector<1x32xf32> to vector<8x32xf32>
    %122 = arith.addf %120, %121 : vector<8x32xf32>
    %c0_49 = arith.constant 0 : index
    %c0_50 = arith.constant 0 : index
    %123 = vector.load %arg11[%c0_49, %c0_50] : memref<32x128xf32, #tpu.memory_space<vmem>>, vector<32x128xf32>
    %cst_51 = arith.constant dense<0.000000e+00> : vector<8x128xf32>
    %124 = tpu.matmul %122, %123, %cst_51 {dimension_numbers = #tpu.dot_dimension_numbers<[1], [0], [0], [1], [0, 0, 1, 1], [], []>} : vector<8x32xf32>, vector<32x128xf32>, vector<8x128xf32> -> vector<8x128xf32>
    %c0_52 = arith.constant 0 : index
    %c0_53 = arith.constant 0 : index
    %125 = vector.load %arg12[%c0_52, %c0_53] : memref<1x128xf32, #tpu.memory_space<vmem>>, vector<1x128xf32>
    %126 = vector.broadcast %125 : vector<1x128xf32> to vector<8x128xf32>
    %127 = arith.addf %124, %126 : vector<8x128xf32>
    %cst_54 = arith.constant 5.000000e-01 : f32
    %128 = vector.broadcast %cst_54 : f32 to vector<8x128xf32>
    %129 = arith.mulf %128, %127 : vector<8x128xf32>
    %cst_55 = arith.constant 2.000000e+00 : f32
    %130 = math.sqrt %cst_55 : f32
    %131 = vector.broadcast %130 : f32 to vector<8x128xf32>
    %132 = arith.divf %127, %131 : vector<8x128xf32>
    %133 = math.erf %132 : vector<8x128xf32>
    %cst_56 = arith.constant 1.000000e+00 : f32
    %134 = vector.broadcast %cst_56 : f32 to vector<8x128xf32>
    %135 = arith.addf %134, %133 : vector<8x128xf32>
    %136 = arith.mulf %129, %135 : vector<8x128xf32>
    %c0_57 = arith.constant 0 : index
    %c0_58 = arith.constant 0 : index
    %137 = vector.load %arg13[%c0_57, %c0_58] : memref<128x32xf32, #tpu.memory_space<vmem>>, vector<128x32xf32>
    %cst_59 = arith.constant dense<0.000000e+00> : vector<8x32xf32>
    %138 = tpu.matmul %136, %137, %cst_59 {dimension_numbers = #tpu.dot_dimension_numbers<[1], [0], [0], [1], [0, 0, 1, 1], [], []>} : vector<8x128xf32>, vector<128x32xf32>, vector<8x32xf32> -> vector<8x32xf32>
    %c0_60 = arith.constant 0 : index
    %c0_61 = arith.constant 0 : index
    %139 = vector.load %arg14[%c0_60, %c0_61] : memref<1x32xf32, #tpu.memory_space<vmem>>, vector<1x32xf32>
    %140 = vector.broadcast %139 : vector<1x32xf32> to vector<8x32xf32>
    %141 = arith.addf %138, %140 : vector<8x32xf32>
    %142 = arith.addf %98, %141 : vector<8x32xf32>
    %143 = vector.shape_cast %142 : vector<8x32xf32> to vector<1x8x32xf32>
    %c0_62 = arith.constant 0 : index
    %c0_63 = arith.constant 0 : index
    %c0_64 = arith.constant 0 : index
    %144 = vector.load %arg15[%c0_62, %c0_63, %c0_64] : memref<1x8x32xf32, #tpu.memory_space<vmem>>, vector<1x8x32xf32>
    tpu.vector_store %arg15[%c0_62, %c0_63, %c0_64], %143 {strides = array<i32>} : memref<1x8x32xf32, #tpu.memory_space<vmem>>, vector<1x8x32xf32>,
    return
  }
  func.func @transform_0(%arg0: i32) -> (i32, i32, i32) {
    %c0_i32 = arith.constant 0 : i32
    %c0_i32_0 = arith.constant 0 : i32
    %c0_i32_1 = arith.constant 0 : i32
    return %arg0, %c0_i32, %c0_i32_0 : i32, i32, i32
  }
  func.func @transform_1(%arg0: i32) -> (i32, i32) {
    %c0_i32 = arith.constant 0 : i32
    %c0_i32_0 = arith.constant 0 : i32
    %c0_i32_1 = arith.constant 0 : i32
    return %c0_i32, %c0_i32_0 : i32, i32
  }
  func.func @transform_2(%arg0: i32) -> (i32, i32) {
    %c0_i32 = arith.constant 0 : i32
    %c0_i32_0 = arith.constant 0 : i32
    %c0_i32_1 = arith.constant 0 : i32
    return %c0_i32, %c0_i32_0 : i32, i32
  }
  func.func @transform_3(%arg0: i32) -> (i32, i32) {
    %c0_i32 = arith.constant 0 : i32
    %c0_i32_0 = arith.constant 0 : i32
    %c0_i32_1 = arith.constant 0 : i32
    return %c0_i32, %c0_i32_0 : i32, i32
  }
  func.func @transform_4(%arg0: i32) -> (i32, i32) {
    %c0_i32 = arith.constant 0 : i32
    %c0_i32_0 = arith.constant 0 : i32
    %c0_i32_1 = arith.constant 0 : i32
    return %c0_i32, %c0_i32_0 : i32, i32
  }
  func.func @transform_5(%arg0: i32) -> (i32, i32) {
    %c0_i32 = arith.constant 0 : i32
    %c0_i32_0 = arith.constant 0 : i32
    %c0_i32_1 = arith.constant 0 : i32
    return %c0_i32, %c0_i32_0 : i32, i32
  }
  func.func @transform_6(%arg0: i32) -> (i32, i32) {
    %c0_i32 = arith.constant 0 : i32
    %c0_i32_0 = arith.constant 0 : i32
    %c0_i32_1 = arith.constant 0 : i32
    return %c0_i32, %c0_i32_0 : i32, i32
  }
  func.func @transform_7(%arg0: i32) -> (i32, i32) {
    %c0_i32 = arith.constant 0 : i32
    %c0_i32_0 = arith.constant 0 : i32
    %c0_i32_1 = arith.constant 0 : i32
    return %c0_i32, %c0_i32_0 : i32, i32
  }
  func.func @transform_8(%arg0: i32) -> (i32, i32) {
    %c0_i32 = arith.constant 0 : i32
    %c0_i32_0 = arith.constant 0 : i32
    %c0_i32_1 = arith.constant 0 : i32
    return %c0_i32, %c0_i32_0 : i32, i32
  }
  func.func @transform_9(%arg0: i32) -> (i32, i32) {
    %c0_i32 = arith.constant 0 : i32
    %c0_i32_0 = arith.constant 0 : i32
    %c0_i32_1 = arith.constant 0 : i32
    return %c0_i32, %c0_i32_0 : i32, i32
  }
  func.func @transform_10(%arg0: i32) -> (i32, i32) {
    %c0_i32 = arith.constant 0 : i32
    %c0_i32_0 = arith.constant 0 : i32
    %c0_i32_1 = arith.constant 0 : i32
    return %c0_i32, %c0_i32_0 : i32, i32
  }
  func.func @transform_11(%arg0: i32) -> (i32, i32) {
    %c0_i32 = arith.constant 0 : i32
    %c0_i32_0 = arith.constant 0 : i32
    %c0_i32_1 = arith.constant 0 : i32
    return %c0_i32, %c0_i32_0 : i32, i32
  }
  func.func @transform_12(%arg0: i32) -> (i32, i32) {
    %c0_i32 = arith.constant 0 : i32
    %c0_i32_0 = arith.constant 0 : i32
    %c0_i32_1 = arith.constant 0 : i32
    return %c0_i32, %c0_i32_0 : i32, i32
  }
  func.func @transform_13(%arg0: i32) -> (i32, i32) {
    %c0_i32 = arith.constant 0 : i32
    %c0_i32_0 = arith.constant 0 : i32
    %c0_i32_1 = arith.constant 0 : i32
    return %c0_i32, %c0_i32_0 : i32, i32
  }
  func.func @transform_14(%arg0: i32) -> (i32, i32, i32) {
    %c0_i32 = arith.constant 0 : i32
    %c0_i32_0 = arith.constant 0 : i32
    %c0_i32_1 = arith.constant 0 : i32
    return %arg0, %c0_i32, %c0_i32_0 : i32, i32, i32
  }
}

</mosaic_0001>

<llo_original>
// kernel: tpu_custom_call.1
$region0: #{tpu_custom_call.1}
  #allocation0 [shape = 'u32[]', space=smem, size = 0x4, offset = 0x4, fixed_abs, tag = 'smem constant byte address 0x4 - core index']
  #allocation1 [shape = 'u32[144,128]{1,0:T(1,128)}', space=vmem, size = 0x12000, scoped, tag = 'internal scratch']
  %s0 = inlined_call_operand.hbm [shape: f32[2,8,32], index: 0, kind: input, shape index: {}]
  %s1 = inlined_call_operand.vmem [shape: f32[1,32], index: 1, kind: input, shape index: {}]
  %s2 = inlined_call_operand.vmem [shape: f32[1,32], index: 2, kind: input, shape index: {}]
  %s3 = inlined_call_operand.vmem [shape: f32[32,32], index: 3, kind: input, shape index: {}]
  %s4 = inlined_call_operand.vmem [shape: f32[32,32], index: 4, kind: input, shape index: {}]
  %s5 = inlined_call_operand.vmem [shape: f32[32,32], index: 5, kind: input, shape index: {}]
  %s6 = inlined_call_operand.vmem [shape: f32[32,32], index: 6, kind: input, shape index: {}]
  %s7 = inlined_call_operand.vmem [shape: f32[1,32], index: 7, kind: input, shape index: {}]
  %s8 = inlined_call_operand.vmem [shape: f32[1,32], index: 8, kind: input, shape index: {}]
  %s9 = inlined_call_operand.vmem [shape: f32[1,32], index: 9, kind: input, shape index: {}]
  %s10 = inlined_call_operand.vmem [shape: f32[32,128], index: 10, kind: input, shape index: {}]
  %s11 = inlined_call_operand.vmem [shape: f32[1,128], index: 11, kind: input, shape index: {}]
  %s12 = inlined_call_operand.vmem [shape: f32[128,32], index: 12, kind: input, shape index: {}]
  %s13 = inlined_call_operand.vmem [shape: f32[1,32], index: 13, kind: input, shape index: {}]
  %s14 = inlined_call_operand.hbm [shape: f32[2,8,32], index: 14, kind: output, shape index: {}]
  %s15 = sld [smem:[#allocation0]]
  $region93: #{tpu_custom_call.1} parent=0
    _
  %s17 = ssub.s32 1, %s15
  %s18 = scalar_select 0, %s17, %s15
  $region1: #{tpu_custom_call.1} parent=0
    #allocation2 [shape = 'u8[8192]{0}', space=vmem, size = 0x2000, scoped, tag = 'input window, operand 0']
    #allocation3 [shape = 's32[2]{0}', space=sflag, size = 0x8, scoped, tag = 'scoped memory for tpu_custom_call.1']
    #allocation4 [shape = 's32[2]{0}', space=sflag, size = 0x8, scoped, tag = 'scoped memory for tpu_custom_call.1']
    #allocation5 [shape = 'u8[8192]{0}', space=vmem, size = 0x2000, scoped, tag = 'output window, operand 0']
    %19 = vsyncpa [#allocation3], 0
    %s20 = scalar_lea.sflag [#allocation3], 1
    %21 = vsyncpa %s20, 0
    %22 = vsyncpa [#allocation4], 0
    %s23 = scalar_lea.sflag [#allocation4], 1
    %24 = vsyncpa %s23, 0
    loop: start=0, step=1, limit=4
    $region2: #{tpu_custom_call.1} parent=1 // loop_pre_header
      _
    $region3: #{tpu_custom_call.1} parent=1 // loop_header
      %s26 = sphi 0, %s30
      %p27 = scmp.ge.s32.totalorder %s26, 4
      %s36 = sphi 0, %s38
      %s39 = sphi 0, %s36
      %s40 = sphi 0, %s39
      %s56 = sphi 0, %s40
      %s60 = sphi 0, %s60
      %s62 = sphi 0, %s60
      %s63 = sphi 0, %s62
      %s77 = sphi 0, %s63
      %s81 = sphi 0, %s81
      %s83 = sphi 0, %s81
      %s84 = sphi 0, %s83
      %s98 = sphi 0, %s84
      %s102 = sphi 0, %s102
      %s104 = sphi 0, %s102
      %s105 = sphi 0, %s104
      %s119 = sphi 0, %s105
      %s123 = sphi 0, %s123
      %s125 = sphi 0, %s123
      %s126 = sphi 0, %s125
      %s140 = sphi 0, %s126
      %s144 = sphi 0, %s144
      %s146 = sphi 0, %s144
      %s147 = sphi 0, %s146
      %s161 = sphi 0, %s147
      %s165 = sphi 0, %s165
      %s167 = sphi 0, %s165
      %s168 = sphi 0, %s167
      %s182 = sphi 0, %s168
      %s186 = sphi 0, %s186
      %s188 = sphi 0, %s186
      %s189 = sphi 0, %s188
      %s203 = sphi 0, %s189
      %s207 = sphi 0, %s207
      %s209 = sphi 0, %s207
      %s210 = sphi 0, %s209
      %s224 = sphi 0, %s210
      %s228 = sphi 0, %s228
      %s230 = sphi 0, %s228
      %s231 = sphi 0, %s230
      %s245 = sphi 0, %s231
      %s249 = sphi 0, %s249
      %s251 = sphi 0, %s249
      %s252 = sphi 0, %s251
      %s266 = sphi 0, %s252
      %s270 = sphi 0, %s270
      %s272 = sphi 0, %s270
      %s273 = sphi 0, %s272
      %s287 = sphi 0, %s273
      %s291 = sphi 0, %s291
      %s293 = sphi 0, %s291
      %s294 = sphi 0, %s293
      %s308 = sphi 0, %s294
      %s312 = sphi 0, %s312
      %s314 = sphi 0, %s312
      %s315 = sphi 0, %s314
      %s329 = sphi 0, %s315
      %s335 = sphi 0, %s337
      %s338 = sphi 0, %s335
      %s339 = sphi 0, %s338
      %s355 = sphi 0, %s339
    $region4: #{tpu_custom_call.1} parent=1 // loop_header_branch
      %29 = sbr.rel (%p27) target = $region8
    $region5: #{tpu_custom_call.1} parent=1 // loop_body
      %s31 = ssub.s32 %s26, 1
      %s32 = ssub.s32 %s26, 2
      %s33 = sadd.s32 %s26, 1
      %s34 = ssub.s32 %s26, %s33
      %p35 = scmp.eq.s32.totalorder %s34, 0
      %s37 = sadd.s32 %s36, 1
      %s38 = scalar_select %p35, %s36, %s37
      %p41 = pneg %p35
      %p42 = scmp.eq.s32.totalorder %s26, 1
      %p43 = por %p41, %p42
      %p44 = scmp.ne.s32.totalorder %s36, %s39
      %p45 = scmp.eq.s32.totalorder %s26, 0
      %p46 = por %p44, %p45
      %p47 = scmp.ne.s32.totalorder %s36, %s39
      %p48 = scmp.eq.s32.totalorder %s31, 1
      %p49 = por %p47, %p48
      %p50 = scmp.ne.s32.totalorder %s39, %s40
      %p51 = scmp.eq.s32.totalorder %s31, 0
      %p52 = por %p50, %p51
      %p53 = scmp.ne.s32.totalorder %s39, %s40
      %p54 = scmp.eq.s32.totalorder %s32, 1
      %p55 = por %p53, %p54
      %p57 = scmp.ne.s32.totalorder %s40, %s56
      %p58 = scmp.eq.s32.totalorder %s32, 0
      %p59 = por %p57, %p58
      %s61 = sadd.s32 %s60, 1
      %p64 = scmp.eq.s32.totalorder %s26, 1
      %p65 = scmp.ne.s32.totalorder %s60, %s62
      %p66 = scmp.eq.s32.totalorder %s26, 0
      %p67 = por %p65, %p66
      %p68 = scmp.ne.s32.totalorder %s60, %s62
      %p69 = scmp.eq.s32.totalorder %s31, 1
      %p70 = por %p68, %p69
      %p71 = scmp.ne.s32.totalorder %s62, %s63
      %p72 = scmp.eq.s32.totalorder %s31, 0
      %p73 = por %p71, %p72
      %p74 = scmp.ne.s32.totalorder %s62, %s63
      %p75 = scmp.eq.s32.totalorder %s32, 1
      %p76 = por %p74, %p75
      %p78 = scmp.ne.s32.totalorder %s63, %s77
      %p79 = scmp.eq.s32.totalorder %s32, 0
      %p80 = por %p78, %p79
      %s82 = sadd.s32 %s81, 1
      %p85 = scmp.eq.s32.totalorder %s26, 1
      %p86 = scmp.ne.s32.totalorder %s81, %s83
      %p87 = scmp.eq.s32.totalorder %s26, 0
      %p88 = por %p86, %p87
      %p89 = scmp.ne.s32.totalorder %s81, %s83
      %p90 = scmp.eq.s32.totalorder %s31, 1
      %p91 = por %p89, %p90
      %p92 = scmp.ne.s32.totalorder %s83, %s84
      %p93 = scmp.eq.s32.totalorder %s31, 0
      %p94 = por %p92, %p93
      %p95 = scmp.ne.s32.totalorder %s83, %s84
      %p96 = scmp.eq.s32.totalorder %s32, 1
      %p97 = por %p95, %p96
      %p99 = scmp.ne.s32.totalorder %s84, %s98
      %p100 = scmp.eq.s32.totalorder %s32, 0
      %p101 = por %p99, %p100
      %s103 = sadd.s32 %s102, 1
      %p106 = scmp.eq.s32.totalorder %s26, 1
      %p107 = scmp.ne.s32.totalorder %s102, %s104
      %p108 = scmp.eq.s32.totalorder %s26, 0
      %p109 = por %p107, %p108
      %p110 = scmp.ne.s32.totalorder %s102, %s104
      %p111 = scmp.eq.s32.totalorder %s31, 1
      %p112 = por %p110, %p111
      %p113 = scmp.ne.s32.totalorder %s104, %s105
      %p114 = scmp.eq.s32.totalorder %s31, 0
      %p115 = por %p113, %p114
      %p116 = scmp.ne.s32.totalorder %s104, %s105
      %p117 = scmp.eq.s32.totalorder %s32, 1
      %p118 = por %p116, %p117
      %p120 = scmp.ne.s32.totalorder %s105, %s119
      %p121 = scmp.eq.s32.totalorder %s32, 0
      %p122 = por %p120, %p121
      %s124 = sadd.s32 %s123, 1
      %p127 = scmp.eq.s32.totalorder %s26, 1
      %p128 = scmp.ne.s32.totalorder %s123, %s125
      %p129 = scmp.eq.s32.totalorder %s26, 0
      %p130 = por %p128, %p129
      %p131 = scmp.ne.s32.totalorder %s123, %s125
      %p132 = scmp.eq.s32.totalorder %s31, 1
      %p133 = por %p131, %p132
      %p134 = scmp.ne.s32.totalorder %s125, %s126
      %p135 = scmp.eq.s32.totalorder %s31, 0
      %p136 = por %p134, %p135
      %p137 = scmp.ne.s32.totalorder %s125, %s126
      %p138 = scmp.eq.s32.totalorder %s32, 1
      %p139 = por %p137, %p138
      %p141 = scmp.ne.s32.totalorder %s126, %s140
      %p142 = scmp.eq.s32.totalorder %s32, 0
      %p143 = por %p141, %p142
      %s145 = sadd.s32 %s144, 1
      %p148 = scmp.eq.s32.totalorder %s26, 1
      %p149 = scmp.ne.s32.totalorder %s144, %s146
      %p150 = scmp.eq.s32.totalorder %s26, 0
      %p151 = por %p149, %p150
      %p152 = scmp.ne.s32.totalorder %s144, %s146
      %p153 = scmp.eq.s32.totalorder %s31, 1
      %p154 = por %p152, %p153
      %p155 = scmp.ne.s32.totalorder %s146, %s147
      %p156 = scmp.eq.s32.totalorder %s31, 0
      %p157 = por %p155, %p156
      %p158 = scmp.ne.s32.totalorder %s146, %s147
      %p159 = scmp.eq.s32.totalorder %s32, 1
      %p160 = por %p158, %p159
      %p162 = scmp.ne.s32.totalorder %s147, %s161
      %p163 = scmp.eq.s32.totalorder %s32, 0
      %p164 = por %p162, %p163
      %s166 = sadd.s32 %s165, 1
      %p169 = scmp.eq.s32.totalorder %s26, 1
      %p170 = scmp.ne.s32.totalorder %s165, %s167
      %p171 = scmp.eq.s32.totalorder %s26, 0
      %p172 = por %p170, %p171
      %p173 = scmp.ne.s32.totalorder %s165, %s167
      %p174 = scmp.eq.s32.totalorder %s31, 1
      %p175 = por %p173, %p174
      %p176 = scmp.ne.s32.totalorder %s167, %s168
      %p177 = scmp.eq.s32.totalorder %s31, 0
      %p178 = por %p176, %p177
      %p179 = scmp.ne.s32.totalorder %s167, %s168
      %p180 = scmp.eq.s32.totalorder %s32, 1
      %p181 = por %p179, %p180
      %p183 = scmp.ne.s32.totalorder %s168, %s182
      %p184 = scmp.eq.s32.totalorder %s32, 0
      %p185 = por %p183, %p184
      %s187 = sadd.s32 %s186, 1
      %p190 = scmp.eq.s32.totalorder %s26, 1
      %p191 = scmp.ne.s32.totalorder %s186, %s188
      %p192 = scmp.eq.s32.totalorder %s26, 0
      %p193 = por %p191, %p192
      %p194 = scmp.ne.s32.totalorder %s186, %s188
      %p195 = scmp.eq.s32.totalorder %s31, 1
      %p196 = por %p194, %p195
      %p197 = scmp.ne.s32.totalorder %s188, %s189
      %p198 = scmp.eq.s32.totalorder %s31, 0
      %p199 = por %p197, %p198
      %p200 = scmp.ne.s32.totalorder %s188, %s189
      %p201 = scmp.eq.s32.totalorder %s32, 1
      %p202 = por %p200, %p201
      %p204 = scmp.ne.s32.totalorder %s189, %s203
      %p205 = scmp.eq.s32.totalorder %s32, 0
      %p206 = por %p204, %p205
      %s208 = sadd.s32 %s207, 1
      %p211 = scmp.eq.s32.totalorder %s26, 1
      %p212 = scmp.ne.s32.totalorder %s207, %s209
      %p213 = scmp.eq.s32.totalorder %s26, 0
      %p214 = por %p212, %p213
      %p215 = scmp.ne.s32.totalorder %s207, %s209
      %p216 = scmp.eq.s32.totalorder %s31, 1
      %p217 = por %p215, %p216
      %p218 = scmp.ne.s32.totalorder %s209, %s210
      %p219 = scmp.eq.s32.totalorder %s31, 0
      %p220 = por %p218, %p219
      %p221 = scmp.ne.s32.totalorder %s209, %s210
      %p222 = scmp.eq.s32.totalorder %s32, 1
      %p223 = por %p221, %p222
      %p225 = scmp.ne.s32.totalorder %s210, %s224
      %p226 = scmp.eq.s32.totalorder %s32, 0
      %p227 = por %p225, %p226
      %s229 = sadd.s32 %s228, 1
      %p232 = scmp.eq.s32.totalorder %s26, 1
      %p233 = scmp.ne.s32.totalorder %s228, %s230
      %p234 = scmp.eq.s32.totalorder %s26, 0
      %p235 = por %p233, %p234
      %p236 = scmp.ne.s32.totalorder %s228, %s230
      %p237 = scmp.eq.s32.totalorder %s31, 1
      %p238 = por %p236, %p237
      %p239 = scmp.ne.s32.totalorder %s230, %s231
      %p240 = scmp.eq.s32.totalorder %s31, 0
      %p241 = por %p239, %p240
      %p242 = scmp.ne.s32.totalorder %s230, %s231
      %p243 = scmp.eq.s32.totalorder %s32, 1
      %p244 = por %p242, %p243
      %p246 = scmp.ne.s32.totalorder %s231, %s245
      %p247 = scmp.eq.s32.totalorder %s32, 0
      %p248 = por %p246, %p247
      %s250 = sadd.s32 %s249, 1
      %p253 = scmp.eq.s32.totalorder %s26, 1
      %p254 = scmp.ne.s32.totalorder %s249, %s251
      %p255 = scmp.eq.s32.totalorder %s26, 0
      %p256 = por %p254, %p255
      %p257 = scmp.ne.s32.totalorder %s249, %s251
      %p258 = scmp.eq.s32.totalorder %s31, 1
      %p259 = por %p257, %p258
      %p260 = scmp.ne.s32.totalorder %s251, %s252
      %p261 = scmp.eq.s32.totalorder %s31, 0
      %p262 = por %p260, %p261
      %p263 = scmp.ne.s32.totalorder %s251, %s252
      %p264 = scmp.eq.s32.totalorder %s32, 1
      %p265 = por %p263, %p264
      %p267 = scmp.ne.s32.totalorder %s252, %s266
      %p268 = scmp.eq.s32.totalorder %s32, 0
      %p269 = por %p267, %p268
      %s271 = sadd.s32 %s270, 1
      %p274 = scmp.eq.s32.totalorder %s26, 1
      %p275 = scmp.ne.s32.totalorder %s270, %s272
      %p276 = scmp.eq.s32.totalorder %s26, 0
      %p277 = por %p275, %p276
      %p278 = scmp.ne.s32.totalorder %s270, %s272
      %p279 = scmp.eq.s32.totalorder %s31, 1
      %p280 = por %p278, %p279
      %p281 = scmp.ne.s32.totalorder %s272, %s273
      %p282 = scmp.eq.s32.totalorder %s31, 0
      %p283 = por %p281, %p282
      %p284 = scmp.ne.s32.totalorder %s272, %s273
      %p285 = scmp.eq.s32.totalorder %s32, 1
      %p286 = por %p284, %p285
      %p288 = scmp.ne.s32.totalorder %s273, %s287
      %p289 = scmp.eq.s32.totalorder %s32, 0
      %p290 = por %p288, %p289
      %s292 = sadd.s32 %s291, 1
      %p295 = scmp.eq.s32.totalorder %s26, 1
      %p296 = scmp.ne.s32.totalorder %s291, %s293
      %p297 = scmp.eq.s32.totalorder %s26, 0
      %p298 = por %p296, %p297
      %p299 = scmp.ne.s32.totalorder %s291, %s293
      %p300 = scmp.eq.s32.totalorder %s31, 1
      %p301 = por %p299, %p300
      %p302 = scmp.ne.s32.totalorder %s293, %s294
      %p303 = scmp.eq.s32.totalorder %s31, 0
      %p304 = por %p302, %p303
      %p305 = scmp.ne.s32.totalorder %s293, %s294
      %p306 = scmp.eq.s32.totalorder %s32, 1
      %p307 = por %p305, %p306
      %p309 = scmp.ne.s32.totalorder %s294, %s308
      %p310 = scmp.eq.s32.totalorder %s32, 0
      %p311 = por %p309, %p310
      %s313 = sadd.s32 %s312, 1
      %p316 = scmp.eq.s32.totalorder %s26, 1
      %p317 = scmp.ne.s32.totalorder %s312, %s314
      %p318 = scmp.eq.s32.totalorder %s26, 0
      %p319 = por %p317, %p318
      %p320 = scmp.ne.s32.totalorder %s312, %s314
      %p321 = scmp.eq.s32.totalorder %s31, 1
      %p322 = por %p320, %p321
      %p323 = scmp.ne.s32.totalorder %s314, %s315
      %p324 = scmp.eq.s32.totalorder %s31, 0
      %p325 = por %p323, %p324
      %p326 = scmp.ne.s32.totalorder %s314, %s315
      %p327 = scmp.eq.s32.totalorder %s32, 1
      %p328 = por %p326, %p327
      %p330 = scmp.ne.s32.totalorder %s315, %s329
      %p331 = scmp.eq.s32.totalorder %s32, 0
      %p332 = por %p330, %p331
      %s333 = ssub.s32 %s26, %s33
      %p334 = scmp.eq.s32.totalorder %s333, 0
      %s336 = sadd.s32 %s335, 1
      %s337 = scalar_select %p334, %s335, %s336
      %p340 = pneg %p334
      %p341 = scmp.eq.s32.totalorder %s26, 1
      %p342 = por %p340, %p341
      %p343 = scmp.ne.s32.totalorder %s335, %s338
      %p344 = scmp.eq.s32.totalorder %s26, 0
      %p345 = por %p343, %p344
      %p346 = scmp.ne.s32.totalorder %s335, %s338
      %p347 = scmp.eq.s32.totalorder %s31, 1
      %p348 = por %p346, %p347
      %p349 = scmp.ne.s32.totalorder %s338, %s339
      %p350 = scmp.eq.s32.totalorder %s31, 0
      %p351 = por %p349, %p350
      %p352 = scmp.ne.s32.totalorder %s338, %s339
      %p353 = scmp.eq.s32.totalorder %s32, 1
      %p354 = por %p352, %p353
      %p356 = scmp.ne.s32.totalorder %s339, %s355
      %p357 = scmp.eq.s32.totalorder %s32, 0
      %p358 = por %p356, %p357
      %p359 = scmp.le.s32.totalorder 1, %s26
      %p360 = scmp.lt.s32.totalorder %s26, 3
      %p361 = pnand %p359, %p360
      %p362 = pneg %p361
      // Predicated region
      $region9: #{tpu_custom_call.1} parent=5 // pred_check
        _
      $region10: #{tpu_custom_call.1} parent=5 // pred_check_branch
        %364 = sbr.rel (%p361) target = $region12
      $region11: #{tpu_custom_call.1} parent=5 // pred_region
        %s365 = ssub.s32 %s26, 1
        // Predicated region
        $region13: #{tpu_custom_call.1} parent=11 // pred_check
          %p366 = pneg %p73
        $region14: #{tpu_custom_call.1} parent=11 // pred_check_branch
          %368 = sbr.rel (%p366) target = $region16
        $region15: #{tpu_custom_call.1} parent=11 // pred_region
          _
        $region16: #{tpu_custom_call.1} parent=11 // pred_fallthru
          _
        // Predicated region
        $region17: #{tpu_custom_call.1} parent=11 // pred_check
          %p369 = pneg %p94
        $region18: #{tpu_custom_call.1} parent=11 // pred_check_branch
          %371 = sbr.rel (%p369) target = $region20
        $region19: #{tpu_custom_call.1} parent=11 // pred_region
          _
        $region20: #{tpu_custom_call.1} parent=11 // pred_fallthru
          _
        // Predicated region
        $region21: #{tpu_custom_call.1} parent=11 // pred_check
          %p372 = pneg %p115
        $region22: #{tpu_custom_call.1} parent=11 // pred_check_branch
          %374 = sbr.rel (%p372) target = $region24
        $region23: #{tpu_custom_call.1} parent=11 // pred_region
          _
        $region24: #{tpu_custom_call.1} parent=11 // pred_fallthru
          _
        // Predicated region
        $region25: #{tpu_custom_call.1} parent=11 // pred_check
          %p375 = pneg %p136
        $region26: #{tpu_custom_call.1} parent=11 // pred_check_branch
          %377 = sbr.rel (%p375) target = $region28
        $region27: #{tpu_custom_call.1} parent=11 // pred_region
          _
        $region28: #{tpu_custom_call.1} parent=11 // pred_fallthru
          _
        // Predicated region
        $region29: #{tpu_custom_call.1} parent=11 // pred_check
          %p378 = pneg %p157
        $region30: #{tpu_custom_call.1} parent=11 // pred_check_branch
          %380 = sbr.rel (%p378) target = $region32
        $region31: #{tpu_custom_call.1} parent=11 // pred_region
          _
        $region32: #{tpu_custom_call.1} parent=11 // pred_fallthru
          _
        // Predicated region
        $region33: #{tpu_custom_call.1} parent=11 // pred_check
          %p381 = pneg %p178
        $region34: #{tpu_custom_call.1} parent=11 // pred_check_branch
          %383 = sbr.rel (%p381) target = $region36
        $region35: #{tpu_custom_call.1} parent=11 // pred_region
          _
        $region36: #{tpu_custom_call.1} parent=11 // pred_fallthru
          _
        // Predicated region
        $region37: #{tpu_custom_call.1} parent=11 // pred_check
          %p384 = pneg %p199
        $region38: #{tpu_custom_call.1} parent=11 // pred_check_branch
          %386 = sbr.rel (%p384) target = $region40
        $region39: #{tpu_custom_call.1} parent=11 // pred_region
          _
        $region40: #{tpu_custom_call.1} parent=11 // pred_fallthru
          _
        // Predicated region
        $region41: #{tpu_custom_call.1} parent=11 // pred_check
          %p387 = pneg %p220
        $region42: #{tpu_custom_call.1} parent=11 // pred_check_branch
          %389 = sbr.rel (%p387) target = $region44
        $region43: #{tpu_custom_call.1} parent=11 // pred_region
          _
        $region44: #{tpu_custom_call.1} parent=11 // pred_fallthru
          _
        // Predicated region
        $region45: #{tpu_custom_call.1} parent=11 // pred_check
          %p390 = pneg %p241
        $region46: #{tpu_custom_call.1} parent=11 // pred_check_branch
          %392 = sbr.rel (%p390) target = $region48
        $region47: #{tpu_custom_call.1} parent=11 // pred_region
          _
        $region48: #{tpu_custom_call.1} parent=11 // pred_fallthru
          _
        // Predicated region
        $region49: #{tpu_custom_call.1} parent=11 // pred_check
          %p393 = pneg %p262
        $region50: #{tpu_custom_call.1} parent=11 // pred_check_branch
          %395 = sbr.rel (%p393) target = $region52
        $region51: #{tpu_custom_call.1} parent=11 // pred_region
          _
        $region52: #{tpu_custom_call.1} parent=11 // pred_fallthru
          _
        // Predicated region
        $region53: #{tpu_custom_call.1} parent=11 // pred_check
          %p396 = pneg %p283
        $region54: #{tpu_custom_call.1} parent=11 // pred_check_branch
          %398 = sbr.rel (%p396) target = $region56
        $region55: #{tpu_custom_call.1} parent=11 // pred_region
          _
        $region56: #{tpu_custom_call.1} parent=11 // pred_fallthru
          _
        // Predicated region
        $region57: #{tpu_custom_call.1} parent=11 // pred_check
          %p399 = pneg %p304
        $region58: #{tpu_custom_call.1} parent=11 // pred_check_branch
          %401 = sbr.rel (%p399) target = $region60
        $region59: #{tpu_custom_call.1} parent=11 // pred_region
          _
        $region60: #{tpu_custom_call.1} parent=11 // pred_fallthru
          _
        // Predicated region
        $region61: #{tpu_custom_call.1} parent=11 // pred_check
          %p402 = pneg %p325
        $region62: #{tpu_custom_call.1} parent=11 // pred_check_branch
          %404 = sbr.rel (%p402) target = $region64
        $region63: #{tpu_custom_call.1} parent=11 // pred_region
          _
        $region64: #{tpu_custom_call.1} parent=11 // pred_fallthru
          _
      $region12: #{tpu_custom_call.1} parent=5 // pred_fallthru
        _
      %p405 = scmp.lt.s32.totalorder %s26, 2
      // Predicated region
      $region65: #{tpu_custom_call.1} parent=5 // pred_check
        %p406 = pneg %p405
      $region66: #{tpu_custom_call.1} parent=5 // pred_check_branch
        %408 = sbr.rel (%p406) target = $region68
      $region67: #{tpu_custom_call.1} parent=5 // pred_region
        // Predicated region
        $region69: #{tpu_custom_call.1} parent=67 // pred_check
          %p409 = pneg %p46
        $region70: #{tpu_custom_call.1} parent=67 // pred_check_branch
          %411 = sbr.rel (%p409) target = $region72
        $region71: #{tpu_custom_call.1} parent=67 // pred_region
          %s412 = sand.u32 %s36, 1
          %s413 = scalar_lea.sflag [#allocation3], %s412
          %s414 = sand.u32 %s36, 1
          %s415 = smul.addr %s414, 8
          %s416 = scalar_lea.vmem [#allocation2], %s415
          %s418 = ssub.s32 128, 128
          %419 = vsyncadd %s413, %s418
          %s420 = smul.addr %s26, 128
          %s421 = scalar_lea.hbm %s0, %s420
          %s423 = sshll.u32 %s416, 4
          %s424 = int_to_ptr.vmem [resolvable:$true] %s423
          %426 = dma.hbm_to_vmem [thread:$0]  %s421, 128, %s424, %s413
        $region72: #{tpu_custom_call.1} parent=67 // pred_fallthru
          _
      $region68: #{tpu_custom_call.1} parent=5 // pred_fallthru
        _
      %p427 = scmp.le.s32.totalorder 1, %s26
      %p428 = scmp.lt.s32.totalorder %s26, 3
      %p429 = pnand %p427, %p428
      %p430 = pneg %p429
      // Predicated region
      $region73: #{tpu_custom_call.1} parent=5 // pred_check
        _
      $region74: #{tpu_custom_call.1} parent=5 // pred_check_branch
        %432 = sbr.rel (%p429) target = $region76
      $region75: #{tpu_custom_call.1} parent=5 // pred_region
        %s433 = ssub.s32 %s26, 1
        %s434 = sand.u32 %s39, 1
        %s435 = scalar_lea.sflag [#allocation3], %s434
        %s436 = sand.u32 %s39, 1
        %s437 = smul.addr %s436, 8
        %s438 = scalar_lea.vmem [#allocation2], %s437
        // Predicated region
        $region77: #{tpu_custom_call.1} parent=75 // pred_check
          %p439 = pneg %p52
        $region78: #{tpu_custom_call.1} parent=75 // pred_check_branch
          %441 = sbr.rel (%p439) target = $region80
        $region79: #{tpu_custom_call.1} parent=75 // pred_region
          %442 = dma.done %s435, 128
        $region80: #{tpu_custom_call.1} parent=75 // pred_fallthru
          _
        %s443 = sand.u32 %s39, 1
        %s444 = scalar_lea.sflag [#allocation3], %s443
        %s445 = sand.u32 %s39, 1
        %s446 = smul.addr %s445, 8
        %s447 = scalar_lea.vmem [#allocation2], %s446
        %p448 = pneg %p52
        %p449 = pneg %p49
        %p450 = pneg %p73
        %p451 = pneg %p70
        %p452 = pneg %p94
        %p453 = pneg %p91
        %p454 = pneg %p115
        %p455 = pneg %p112
        %p456 = pneg %p136
        %p457 = pneg %p133
        %p458 = pneg %p157
        %p459 = pneg %p154
        %p460 = pneg %p178
        %p461 = pneg %p175
        %p462 = pneg %p199
        %p463 = pneg %p196
        %p464 = pneg %p220
        %p465 = pneg %p217
        %p466 = pneg %p241
        %p467 = pneg %p238
        %p468 = pneg %p262
        %p469 = pneg %p259
        %p470 = pneg %p283
        %p471 = pneg %p280
        %p472 = pneg %p304
        %p473 = pneg %p301
        %p474 = pneg %p325
        %p475 = pneg %p322
        %p476 = pneg %p351
        %p477 = pneg %p348
        %s478 = sand.u32 %s338, 1
        %s479 = scalar_lea.sflag [#allocation4], %s478
        %s480 = sand.u32 %s338, 1
        %s481 = smul.addr %s480, 8
        %s482 = scalar_lea.vmem [#allocation5], %s481
        %v483 = vld [vmem:[%s438] sm:$0xff]
        %v484 = vld [vmem:[%s1] sm:$0x1]
        %v485 = vld [vmem:[%s2] sm:$0x1]
        %vm486 = vcmask 261120
        %v487 = vsel %vm486, %v483, 0.0
        %488 = vadd.xlane.f32.xlu0 %v487
        %v489 = vpop.xlane.xlu0 %488
        %v490 = vrcp.pop 32.0
        %v491 = vmul.f32 %v489, %v490
        %v492 = vsub.f32 %v483, %v491
        %v493 = vmul.f32 %v492, %v492
        %v494 = vsel %vm486, %v493, 0.0
        %495 = vadd.xlane.f32.xlu0 %v494
        %v496 = vpop.xlane.xlu0 %495
        %v497 = vmul.f32 %v496, %v490
        %v498 = vadd.f32 %v497, 1e-05
        %v499 = vrsqrt.pop %v498
        %v500 = vmul.f32 %v492, %v499
        %v502 = vlaneseq
        %v503 = vshrl.u32 %v502, 7
        %v504 = vsub.s32 0, %v503
        %v505 = vrot.slane %v484, %v504
        %v507 = vmul.f32 %v500, %v505
        %v509 = vlaneseq
        %v510 = vshrl.u32 %v509, 7
        %v511 = vsub.s32 0, %v510
        %v512 = vrot.slane %v485, %v511
        %v514 = vadd.f32 %v507, %v512
        %v515 = vld [vmem:[%s3] sm:$0xff]
        %v516 = vld [vmem:[%s3 + $0x8] sm:$0xff]
        %v517 = vld [vmem:[%s3 + $0x10] sm:$0xff]
        %v518 = vld [vmem:[%s3 + $0x18] sm:$0xff]
        %v520 = vsel %vm486, %v514, 0
        %522 = vmatprep.subr.mxu0 0.0
        %523 = vmatpush1.msra.mxu0 0.0
        %524 = vmatprep.subr.mxu0 0.0
        %525 = vmatpush1.msra.mxu0 0.0
        %526 = vmatprep.subr.mxu0 0.0
        %527 = vmatpush1.msra.mxu0 0.0
        %528 = vmatprep.subr.mxu0 0.0
        %529 = vmatpush1.msra.mxu0 0.0
        %530 = vmatprep.subr.mxu0 0.0
        %531 = vmatpush1.msra.mxu0 0.0
        %532 = vmatprep.subr.mxu0 0.0
        %533 = vmatpush1.msra.mxu0 0.0
        %534 = vmatprep.subr.mxu0 0.0
        %535 = vmatpush1.msra.mxu0 0.0
        %536 = vmatprep.subr.mxu0 0.0
        %537 = vmatpush1.msra.mxu0 0.0
        %538 = vmatprep.subr.mxu0 0.0
        %539 = vmatpush1.msra.mxu0 0.0
        %540 = vmatprep.subr.mxu0 0.0
        %541 = vmatpush1.msra.mxu0 0.0
        %542 = vmatprep.subr.mxu0 0.0
        %543 = vmatpush1.msra.mxu0 0.0
        %544 = vmatprep.subr.mxu0 0.0
        %545 = vmatpush1.msra.mxu0 0.0
        %546 = vmatprep.subr.mxu0 0.0
        %547 = vmatpush1.msra.mxu0 %v518
        %548 = vmatprep.subr.mxu0 0.0
        %549 = vmatpush1.msra.mxu0 %v517
        %550 = vmatprep.subr.mxu0 0.0
        %551 = vmatpush1.msra.mxu0 %v516
        %552 = vmatprep.subr.mxu0 0.0
        %553 = vmatpush1.msra.mxu0 %v515
        %554 = vmatprep.subr.mxu0 0.0
        %555 = vmatpush2.msra.mxu0 0.0
        %556 = vmatprep.subr.mxu0 0.0
        %557 = vmatpush2.msra.mxu0 0.0
        %558 = vmatprep.subr.mxu0 0.0
        %559 = vmatpush2.msra.mxu0 0.0
        %560 = vmatprep.subr.mxu0 0.0
        %561 = vmatpush2.msra.mxu0 0.0
        %562 = vmatprep.subr.mxu0 0.0
        %563 = vmatpush2.msra.mxu0 0.0
        %564 = vmatprep.subr.mxu0 0.0
        %565 = vmatpush2.msra.mxu0 0.0
        %566 = vmatprep.subr.mxu0 0.0
        %567 = vmatpush2.msra.mxu0 0.0
        %568 = vmatprep.subr.mxu0 0.0
        %569 = vmatpush2.msra.mxu0 0.0
        %570 = vmatprep.subr.mxu0 0.0
        %571 = vmatpush2.msra.mxu0 0.0
        %572 = vmatprep.subr.mxu0 0.0
        %573 = vmatpush2.msra.mxu0 0.0
        %574 = vmatprep.subr.mxu0 0.0
        %575 = vmatpush2.msra.mxu0 0.0
        %576 = vmatprep.subr.mxu0 0.0
        %577 = vmatpush2.msra.mxu0 0.0
        %578 = vmatprep.subr.mxu0 0.0
        %579 = vmatpush2.msra.mxu0 0.0
        %580 = vmatprep.subr.mxu0 0.0
        %581 = vmatpush2.msra.mxu0 0.0
        %582 = vmatprep.subr.mxu0 0.0
        %583 = vmatpush2.msra.mxu0 0.0
        %584 = vmatprep.subr.mxu0 0.0
        %585 = vmatpush2.msra.mxu0 0.0
        %586 = vmatprep.mubr.f32.mxu0 0.0
        %587 = vmatmul.mubr.f32.gmra.mxu0 %v520
        %v588 = vpop.f32.mrf.mxu0
        %v589 = vadd.f32 0.0, %v588
        %v590 = vpop.f32.mrf.mxu0
        %591 = vdwg.mxu0
        %v592 = vld [vmem:[%s4] sm:$0xff]
        %v593 = vld [vmem:[%s4 + $0x8] sm:$0xff]
        %v594 = vld [vmem:[%s4 + $0x10] sm:$0xff]
        %v595 = vld [vmem:[%s4 + $0x18] sm:$0xff]
        %596 = vmatprep.subr.mxu0 0.0
        %597 = vmatpush1.msra.mxu0 0.0
        %598 = vmatprep.subr.mxu0 0.0
        %599 = vmatpush1.msra.mxu0 0.0
        %600 = vmatprep.subr.mxu0 0.0
        %601 = vmatpush1.msra.mxu0 0.0
        %602 = vmatprep.subr.mxu0 0.0
        %603 = vmatpush1.msra.mxu0 0.0
        %604 = vmatprep.subr.mxu0 0.0
        %605 = vmatpush1.msra.mxu0 0.0
        %606 = vmatprep.subr.mxu0 0.0
        %607 = vmatpush1.msra.mxu0 0.0
        %608 = vmatprep.subr.mxu0 0.0
        %609 = vmatpush1.msra.mxu0 0.0
        %610 = vmatprep.subr.mxu0 0.0
        %611 = vmatpush1.msra.mxu0 0.0
        %612 = vmatprep.subr.mxu0 0.0
        %613 = vmatpush1.msra.mxu0 0.0
        %614 = vmatprep.subr.mxu0 0.0
        %615 = vmatpush1.msra.mxu0 0.0
        %616 = vmatprep.subr.mxu0 0.0
        %617 = vmatpush1.msra.mxu0 0.0
        %618 = vmatprep.subr.mxu0 0.0
        %619 = vmatpush1.msra.mxu0 0.0
        %620 = vmatprep.subr.mxu0 0.0
        %621 = vmatpush1.msra.mxu0 %v595
        %622 = vmatprep.subr.mxu0 0.0
        %623 = vmatpush1.msra.mxu0 %v594
        %624 = vmatprep.subr.mxu0 0.0
        %625 = vmatpush1.msra.mxu0 %v593
        %626 = vmatprep.subr.mxu0 0.0
        %627 = vmatpush1.msra.mxu0 %v592
        %628 = vmatprep.subr.mxu0 0.0
        %629 = vmatpush2.msra.mxu0 0.0
        %630 = vmatprep.subr.mxu0 0.0
        %631 = vmatpush2.msra.mxu0 0.0
        %632 = vmatprep.subr.mxu0 0.0
        %633 = vmatpush2.msra.mxu0 0.0
        %634 = vmatprep.subr.mxu0 0.0
        %635 = vmatpush2.msra.mxu0 0.0
        %636 = vmatprep.subr.mxu0 0.0
        %637 = vmatpush2.msra.mxu0 0.0
        %638 = vmatprep.subr.mxu0 0.0
        %639 = vmatpush2.msra.mxu0 0.0
        %640 = vmatprep.subr.mxu0 0.0
        %641 = vmatpush2.msra.mxu0 0.0
        %642 = vmatprep.subr.mxu0 0.0
        %643 = vmatpush2.msra.mxu0 0.0
        %644 = vmatprep.subr.mxu0 0.0
        %645 = vmatpush2.msra.mxu0 0.0
        %646 = vmatprep.subr.mxu0 0.0
        %647 = vmatpush2.msra.mxu0 0.0
        %648 = vmatprep.subr.mxu0 0.0
        %649 = vmatpush2.msra.mxu0 0.0
        %650 = vmatprep.subr.mxu0 0.0
        %651 = vmatpush2.msra.mxu0 0.0
        %652 = vmatprep.subr.mxu0 0.0
        %653 = vmatpush2.msra.mxu0 0.0
        %654 = vmatprep.subr.mxu0 0.0
        %655 = vmatpush2.msra.mxu0 0.0
        %656 = vmatprep.subr.mxu0 0.0
        %657 = vmatpush2.msra.mxu0 0.0
        %658 = vmatprep.subr.mxu0 0.0
        %659 = vmatpush2.msra.mxu0 0.0
        %660 = vmatprep.mubr.f32.mxu0 0.0
        %661 = vmatmul.mubr.f32.gmra.mxu0 %v520
        %v662 = vpop.f32.mrf.mxu0
        %v663 = vadd.f32 0.0, %v662
        %v664 = vpop.f32.mrf.mxu0
        %665 = vdwg.mxu0
        %v666 = vld [vmem:[%s5] sm:$0xff]
        %v667 = vld [vmem:[%s5 + $0x8] sm:$0xff]
        %v668 = vld [vmem:[%s5 + $0x10] sm:$0xff]
        %v669 = vld [vmem:[%s5 + $0x18] sm:$0xff]
        %670 = vmatprep.subr.mxu0 0.0
        %671 = vmatpush1.msra.mxu0 0.0
        %672 = vmatprep.subr.mxu0 0.0
        %673 = vmatpush1.msra.mxu0 0.0
        %674 = vmatprep.subr.mxu0 0.0
        %675 = vmatpush1.msra.mxu0 0.0
        %676 = vmatprep.subr.mxu0 0.0
        %677 = vmatpush1.msra.mxu0 0.0
        %678 = vmatprep.subr.mxu0 0.0
        %679 = vmatpush1.msra.mxu0 0.0
        %680 = vmatprep.subr.mxu0 0.0
        %681 = vmatpush1.msra.mxu0 0.0
        %682 = vmatprep.subr.mxu0 0.0
        %683 = vmatpush1.msra.mxu0 0.0
        %684 = vmatprep.subr.mxu0 0.0
        %685 = vmatpush1.msra.mxu0 0.0
        %686 = vmatprep.subr.mxu0 0.0
        %687 = vmatpush1.msra.mxu0 0.0
        %688 = vmatprep.subr.mxu0 0.0
        %689 = vmatpush1.msra.mxu0 0.0
        %690 = vmatprep.subr.mxu0 0.0
        %691 = vmatpush1.msra.mxu0 0.0
        %692 = vmatprep.subr.mxu0 0.0
        %693 = vmatpush1.msra.mxu0 0.0
        %694 = vmatprep.subr.mxu0 0.0
        %695 = vmatpush1.msra.mxu0 %v669
        %696 = vmatprep.subr.mxu0 0.0
        %697 = vmatpush1.msra.mxu0 %v668
        %698 = vmatprep.subr.mxu0 0.0
        %699 = vmatpush1.msra.mxu0 %v667
        %700 = vmatprep.subr.mxu0 0.0
        %701 = vmatpush1.msra.mxu0 %v666
        %702 = vmatprep.subr.mxu0 0.0
        %703 = vmatpush2.msra.mxu0 0.0
        %704 = vmatprep.subr.mxu0 0.0
        %705 = vmatpush2.msra.mxu0 0.0
        %706 = vmatprep.subr.mxu0 0.0
        %707 = vmatpush2.msra.mxu0 0.0
        %708 = vmatprep.subr.mxu0 0.0
        %709 = vmatpush2.msra.mxu0 0.0
        %710 = vmatprep.subr.mxu0 0.0
        %711 = vmatpush2.msra.mxu0 0.0
        %712 = vmatprep.subr.mxu0 0.0
        %713 = vmatpush2.msra.mxu0 0.0
        %714 = vmatprep.subr.mxu0 0.0
        %715 = vmatpush2.msra.mxu0 0.0
        %716 = vmatprep.subr.mxu0 0.0
        %717 = vmatpush2.msra.mxu0 0.0
        %718 = vmatprep.subr.mxu0 0.0
        %719 = vmatpush2.msra.mxu0 0.0
        %720 = vmatprep.subr.mxu0 0.0
        %721 = vmatpush2.msra.mxu0 0.0
        %722 = vmatprep.subr.mxu0 0.0
        %723 = vmatpush2.msra.mxu0 0.0
        %724 = vmatprep.subr.mxu0 0.0
        %725 = vmatpush2.msra.mxu0 0.0
        %726 = vmatprep.subr.mxu0 0.0
        %727 = vmatpush2.msra.mxu0 0.0
        %728 = vmatprep.subr.mxu0 0.0
        %729 = vmatpush2.msra.mxu0 0.0
        %730 = vmatprep.subr.mxu0 0.0
        %731 = vmatpush2.msra.mxu0 0.0
        %732 = vmatprep.subr.mxu0 0.0
        %733 = vmatpush2.msra.mxu0 0.0
        %734 = vmatprep.mubr.f32.mxu0 0.0
        %735 = vmatmul.mubr.f32.gmra.mxu0 %v520
        %v736 = vpop.f32.mrf.mxu0
        %v737 = vadd.f32 0.0, %v736
        %v738 = vpop.f32.mrf.mxu0
        %739 = vdwg.mxu0
        %vm740 = vcmask 64512
        %v742 = vsel %vm740, %v589, 0
        %v745 = vsel %vm740, %v663, 0
        %747 = vmatprep.subr.mxu0 0.0
        %748 = vmatpush1.xpose.msra.mxu0 0.0
        %749 = vmatprep.subr.mxu0 0.0
        %750 = vmatpush1.xpose.msra.mxu0 0.0
        %751 = vmatprep.subr.mxu0 0.0
        %752 = vmatpush1.xpose.msra.mxu0 0.0
        %753 = vmatprep.subr.mxu0 0.0
        %754 = vmatpush1.xpose.msra.mxu0 0.0
        %755 = vmatprep.subr.mxu0 0.0
        %756 = vmatpush1.xpose.msra.mxu0 0.0
        %757 = vmatprep.subr.mxu0 0.0
        %758 = vmatpush1.xpose.msra.mxu0 0.0
        %759 = vmatprep.subr.mxu0 0.0
        %760 = vmatpush1.xpose.msra.mxu0 0.0
        %761 = vmatprep.subr.mxu0 0.0
        %762 = vmatpush1.xpose.msra.mxu0 0.0
        %763 = vmatprep.subr.mxu0 0.0
        %764 = vmatpush1.xpose.msra.mxu0 0.0
        %765 = vmatprep.subr.mxu0 0.0
        %766 = vmatpush1.xpose.msra.mxu0 0.0
        %767 = vmatprep.subr.mxu0 0.0
        %768 = vmatpush1.xpose.msra.mxu0 0.0
        %769 = vmatprep.subr.mxu0 0.0
        %770 = vmatpush1.xpose.msra.mxu0 0.0
        %771 = vmatprep.subr.mxu0 0.0
        %772 = vmatpush1.xpose.msra.mxu0 0.0
        %773 = vmatprep.subr.mxu0 0.0
        %774 = vmatpush1.xpose.msra.mxu0 0.0
        %775 = vmatprep.subr.mxu0 0.0
        %776 = vmatpush1.xpose.msra.mxu0 0.0
        %777 = vmatprep.subr.mxu0 0.0
        %778 = vmatpush1.xpose.msra.mxu0 %v745
        %779 = vmatprep.subr.mxu0 0.0
        %780 = vmatpush2.xpose.msra.mxu0 0.0
        %781 = vmatprep.subr.mxu0 0.0
        %782 = vmatpush2.xpose.msra.mxu0 0.0
        %783 = vmatprep.subr.mxu0 0.0
        %784 = vmatpush2.xpose.msra.mxu0 0.0
        %785 = vmatprep.subr.mxu0 0.0
        %786 = vmatpush2.xpose.msra.mxu0 0.0
        %787 = vmatprep.subr.mxu0 0.0
        %788 = vmatpush2.xpose.msra.mxu0 0.0
        %789 = vmatprep.subr.mxu0 0.0
        %790 = vmatpush2.xpose.msra.mxu0 0.0
        %791 = vmatprep.subr.mxu0 0.0
        %792 = vmatpush2.xpose.msra.mxu0 0.0
        %793 = vmatprep.subr.mxu0 0.0
        %794 = vmatpush2.xpose.msra.mxu0 0.0
        %795 = vmatprep.subr.mxu0 0.0
        %796 = vmatpush2.xpose.msra.mxu0 0.0
        %797 = vmatprep.subr.mxu0 0.0
        %798 = vmatpush2.xpose.msra.mxu0 0.0
        %799 = vmatprep.subr.mxu0 0.0
        %800 = vmatpush2.xpose.msra.mxu0 0.0
        %801 = vmatprep.subr.mxu0 0.0
        %802 = vmatpush2.xpose.msra.mxu0 0.0
        %803 = vmatprep.subr.mxu0 0.0
        %804 = vmatpush2.xpose.msra.mxu0 0.0
        %805 = vmatprep.subr.mxu0 0.0
        %806 = vmatpush2.xpose.msra.mxu0 0.0
        %807 = vmatprep.subr.mxu0 0.0
        %808 = vmatpush2.xpose.msra.mxu0 0.0
        %809 = vmatprep.subr.mxu0 0.0
        %810 = vmatpush2.xpose.msra.mxu0 0.0
        %811 = vmatprep.mubr.f32.mxu0 0.0
        %812 = vmatmul.mubr.f32.gmra.mxu0 %v742
        %v813 = vpop.f32.mrf.mxu0
        %v814 = vadd.f32 0.0, %v813
        %v815 = vpop.f32.mrf.mxu0
        %816 = vdwg.mxu0
        %v817 = vsel %vm740, %v814, -inf
        %818 = vmax.xlane.f32.xlu0 %v817
        %v819 = vpop.xlane.xlu0 %818
        %v820 = vsub.f32 %v814, %v819
        %v821 = vmul.f32 %v820, 1.442695
        %v822 = vpow.pop %v821
        %v823 = vsel %vm740, %v822, 0.0
        %824 = vadd.xlane.f32.xlu0 %v823
        %v825 = vpop.xlane.xlu0 %824
        %v826 = vrcp.pop %v825
        %v828 = vsel %vm740, %v822, 0
        %830 = vmatprep.subr.mxu0 0.0
        %831 = vmatpush1.msra.mxu0 0.0
        %832 = vmatprep.subr.mxu0 0.0
        %833 = vmatpush1.msra.mxu0 0.0
        %834 = vmatprep.subr.mxu0 0.0
        %835 = vmatpush1.msra.mxu0 0.0
        %836 = vmatprep.subr.mxu0 0.0
        %837 = vmatpush1.msra.mxu0 0.0
        %838 = vmatprep.subr.mxu0 0.0
        %839 = vmatpush1.msra.mxu0 0.0
        %840 = vmatprep.subr.mxu0 0.0
        %841 = vmatpush1.msra.mxu0 0.0
        %842 = vmatprep.subr.mxu0 0.0
        %843 = vmatpush1.msra.mxu0 0.0
        %844 = vmatprep.subr.mxu0 0.0
        %845 = vmatpush1.msra.mxu0 0.0
        %846 = vmatprep.subr.mxu0 0.0
        %847 = vmatpush1.msra.mxu0 0.0
        %848 = vmatprep.subr.mxu0 0.0
        %849 = vmatpush1.msra.mxu0 0.0
        %850 = vmatprep.subr.mxu0 0.0
        %851 = vmatpush1.msra.mxu0 0.0
        %852 = vmatprep.subr.mxu0 0.0
        %853 = vmatpush1.msra.mxu0 0.0
        %854 = vmatprep.subr.mxu0 0.0
        %855 = vmatpush1.msra.mxu0 0.0
        %856 = vmatprep.subr.mxu0 0.0
        %857 = vmatpush1.msra.mxu0 0.0
        %858 = vmatprep.subr.mxu0 0.0
        %859 = vmatpush1.msra.mxu0 0.0
        %860 = vmatprep.subr.mxu0 0.0
        %861 = vmatpush1.msra.mxu0 %v737
        %862 = vmatprep.subr.mxu0 0.0
        %863 = vmatpush2.msra.mxu0 0.0
        %864 = vmatprep.subr.mxu0 0.0
        %865 = vmatpush2.msra.mxu0 0.0
        %866 = vmatprep.subr.mxu0 0.0
        %867 = vmatpush2.msra.mxu0 0.0
        %868 = vmatprep.subr.mxu0 0.0
        %869 = vmatpush2.msra.mxu0 0.0
        %870 = vmatprep.subr.mxu0 0.0
        %871 = vmatpush2.msra.mxu0 0.0
        %872 = vmatprep.subr.mxu0 0.0
        %873 = vmatpush2.msra.mxu0 0.0
        %874 = vmatprep.subr.mxu0 0.0
        %875 = vmatpush2.msra.mxu0 0.0
        %876 = vmatprep.subr.mxu0 0.0
        %877 = vmatpush2.msra.mxu0 0.0
        %878 = vmatprep.subr.mxu0 0.0
        %879 = vmatpush2.msra.mxu0 0.0
        %880 = vmatprep.subr.mxu0 0.0
        %881 = vmatpush2.msra.mxu0 0.0
        %882 = vmatprep.subr.mxu0 0.0
        %883 = vmatpush2.msra.mxu0 0.0
        %884 = vmatprep.subr.mxu0 0.0
        %885 = vmatpush2.msra.mxu0 0.0
        %886 = vmatprep.subr.mxu0 0.0
        %887 = vmatpush2.msra.mxu0 0.0
        %888 = vmatprep.subr.mxu0 0.0
        %889 = vmatpush2.msra.mxu0 0.0
        %890 = vmatprep.subr.mxu0 0.0
        %891 = vmatpush2.msra.mxu0 0.0
        %892 = vmatprep.subr.mxu0 0.0
        %893 = vmatpush2.msra.mxu0 0.0
        %894 = vmatprep.mubr.f32.mxu0 0.0
        %895 = vmatmul.mubr.f32.gmra.mxu0 %v828
        %v896 = vpop.f32.mrf.mxu0
        %v897 = vadd.f32 0.0, %v896
        %v898 = vpop.f32.mrf.mxu0
        %899 = vdwg.mxu0
        %v900 = vmul.f32 %v897, %v826
        %901 = vrot.lane.b32.xlu0 %v589, 120
        %v902 = vpop.permute.xlu0 %901
        %903 = vrot.lane.b32.xlu0 %v663, 120
        %v904 = vpop.permute.xlu0 %903
        %v905 = vsel %vm740, %v902, 0
        %v907 = vsel %vm740, %v904, 0
        %909 = vmatprep.subr.mxu0 0.0
        %910 = vmatpush1.xpose.msra.mxu0 0.0
        %911 = vmatprep.subr.mxu0 0.0
        %912 = vmatpush1.xpose.msra.mxu0 0.0
        %913 = vmatprep.subr.mxu0 0.0
        %914 = vmatpush1.xpose.msra.mxu0 0.0
        %915 = vmatprep.subr.mxu0 0.0
        %916 = vmatpush1.xpose.msra.mxu0 0.0
        %917 = vmatprep.subr.mxu0 0.0
        %918 = vmatpush1.xpose.msra.mxu0 0.0
        %919 = vmatprep.subr.mxu0 0.0
        %920 = vmatpush1.xpose.msra.mxu0 0.0
        %921 = vmatprep.subr.mxu0 0.0
        %922 = vmatpush1.xpose.msra.mxu0 0.0
        %923 = vmatprep.subr.mxu0 0.0
        %924 = vmatpush1.xpose.msra.mxu0 0.0
        %925 = vmatprep.subr.mxu0 0.0
        %926 = vmatpush1.xpose.msra.mxu0 0.0
        %927 = vmatprep.subr.mxu0 0.0
        %928 = vmatpush1.xpose.msra.mxu0 0.0
        %929 = vmatprep.subr.mxu0 0.0
        %930 = vmatpush1.xpose.msra.mxu0 0.0
        %931 = vmatprep.subr.mxu0 0.0
        %932 = vmatpush1.xpose.msra.mxu0 0.0
        %933 = vmatprep.subr.mxu0 0.0
        %934 = vmatpush1.xpose.msra.mxu0 0.0
        %935 = vmatprep.subr.mxu0 0.0
        %936 = vmatpush1.xpose.msra.mxu0 0.0
        %937 = vmatprep.subr.mxu0 0.0
        %938 = vmatpush1.xpose.msra.mxu0 0.0
        %939 = vmatprep.subr.mxu0 0.0
        %940 = vmatpush1.xpose.msra.mxu0 %v907
        %941 = vmatprep.subr.mxu0 0.0
        %942 = vmatpush2.xpose.msra.mxu0 0.0
        %943 = vmatprep.subr.mxu0 0.0
        %944 = vmatpush2.xpose.msra.mxu0 0.0
        %945 = vmatprep.subr.mxu0 0.0
        %946 = vmatpush2.xpose.msra.mxu0 0.0
        %947 = vmatprep.subr.mxu0 0.0
        %948 = vmatpush2.xpose.msra.mxu0 0.0
        %949 = vmatprep.subr.mxu0 0.0
        %950 = vmatpush2.xpose.msra.mxu0 0.0
        %951 = vmatprep.subr.mxu0 0.0
        %952 = vmatpush2.xpose.msra.mxu0 0.0
        %953 = vmatprep.subr.mxu0 0.0
        %954 = vmatpush2.xpose.msra.mxu0 0.0
        %955 = vmatprep.subr.mxu0 0.0
        %956 = vmatpush2.xpose.msra.mxu0 0.0
        %957 = vmatprep.subr.mxu0 0.0
        %958 = vmatpush2.xpose.msra.mxu0 0.0
        %959 = vmatprep.subr.mxu0 0.0
        %960 = vmatpush2.xpose.msra.mxu0 0.0
        %961 = vmatprep.subr.mxu0 0.0
        %962 = vmatpush2.xpose.msra.mxu0 0.0
        %963 = vmatprep.subr.mxu0 0.0
        %964 = vmatpush2.xpose.msra.mxu0 0.0
        %965 = vmatprep.subr.mxu0 0.0
        %966 = vmatpush2.xpose.msra.mxu0 0.0
        %967 = vmatprep.subr.mxu0 0.0
        %968 = vmatpush2.xpose.msra.mxu0 0.0
        %969 = vmatprep.subr.mxu0 0.0
        %970 = vmatpush2.xpose.msra.mxu0 0.0
        %971 = vmatprep.subr.mxu0 0.0
        %972 = vmatpush2.xpose.msra.mxu0 0.0
        %973 = vmatprep.mubr.f32.mxu0 0.0
        %974 = vmatmul.mubr.f32.gmra.mxu0 %v905
        %v975 = vpop.f32.mrf.mxu0
        %v976 = vadd.f32 0.0, %v975
        %v977 = vpop.f32.mrf.mxu0
        %978 = vdwg.mxu0
        %v979 = vsel %vm740, %v976, -inf
        %980 = vmax.xlane.f32.xlu0 %v979
        %v981 = vpop.xlane.xlu0 %980
        %v982 = vsub.f32 %v976, %v981
        %v983 = vmul.f32 %v982, 1.442695
        %v984 = vpow.pop %v983
        %v985 = vsel %vm740, %v984, 0.0
        %986 = vadd.xlane.f32.xlu0 %v985
        %v987 = vpop.xlane.xlu0 %986
        %v988 = vrcp.pop %v987
        %990 = vrot.lane.b32.xlu0 %v737, 120
        %v991 = vpop.permute.xlu0 %990
        %v994 = vsel %vm740, %v984, 0
        %996 = vmatprep.subr.mxu0 0.0
        %997 = vmatpush1.msra.mxu0 0.0
        %998 = vmatprep.subr.mxu0 0.0
        %999 = vmatpush1.msra.mxu0 0.0
        %1000 = vmatprep.subr.mxu0 0.0
        %1001 = vmatpush1.msra.mxu0 0.0
        %1002 = vmatprep.subr.mxu0 0.0
        %1003 = vmatpush1.msra.mxu0 0.0
        %1004 = vmatprep.subr.mxu0 0.0
        %1005 = vmatpush1.msra.mxu0 0.0
        %1006 = vmatprep.subr.mxu0 0.0
        %1007 = vmatpush1.msra.mxu0 0.0
        %1008 = vmatprep.subr.mxu0 0.0
        %1009 = vmatpush1.msra.mxu0 0.0
        %1010 = vmatprep.subr.mxu0 0.0
        %1011 = vmatpush1.msra.mxu0 0.0
        %1012 = vmatprep.subr.mxu0 0.0
        %1013 = vmatpush1.msra.mxu0 0.0
        %1014 = vmatprep.subr.mxu0 0.0
        %1015 = vmatpush1.msra.mxu0 0.0
        %1016 = vmatprep.subr.mxu0 0.0
        %1017 = vmatpush1.msra.mxu0 0.0
        %1018 = vmatprep.subr.mxu0 0.0
        %1019 = vmatpush1.msra.mxu0 0.0
        %1020 = vmatprep.subr.mxu0 0.0
        %1021 = vmatpush1.msra.mxu0 0.0
        %1022 = vmatprep.subr.mxu0 0.0
        %1023 = vmatpush1.msra.mxu0 0.0
        %1024 = vmatprep.subr.mxu0 0.0
        %1025 = vmatpush1.msra.mxu0 0.0
        %1026 = vmatprep.subr.mxu0 0.0
        %1027 = vmatpush1.msra.mxu0 %v991
        %1028 = vmatprep.subr.mxu0 0.0
        %1029 = vmatpush2.msra.mxu0 0.0
        %1030 = vmatprep.subr.mxu0 0.0
        %1031 = vmatpush2.msra.mxu0 0.0
        %1032 = vmatprep.subr.mxu0 0.0
        %1033 = vmatpush2.msra.mxu0 0.0
        %1034 = vmatprep.subr.mxu0 0.0
        %1035 = vmatpush2.msra.mxu0 0.0
        %1036 = vmatprep.subr.mxu0 0.0
        %1037 = vmatpush2.msra.mxu0 0.0
        %1038 = vmatprep.subr.mxu0 0.0
        %1039 = vmatpush2.msra.mxu0 0.0
        %1040 = vmatprep.subr.mxu0 0.0
        %1041 = vmatpush2.msra.mxu0 0.0
        %1042 = vmatprep.subr.mxu0 0.0
        %1043 = vmatpush2.msra.mxu0 0.0
        %1044 = vmatprep.subr.mxu0 0.0
        %1045 = vmatpush2.msra.mxu0 0.0
        %1046 = vmatprep.subr.mxu0 0.0
        %1047 = vmatpush2.msra.mxu0 0.0
        %1048 = vmatprep.subr.mxu0 0.0
        %1049 = vmatpush2.msra.mxu0 0.0
        %1050 = vmatprep.subr.mxu0 0.0
        %1051 = vmatpush2.msra.mxu0 0.0
        %1052 = vmatprep.subr.mxu0 0.0
        %1053 = vmatpush2.msra.mxu0 0.0
        %1054 = vmatprep.subr.mxu0 0.0
        %1055 = vmatpush2.msra.mxu0 0.0
        %1056 = vmatprep.subr.mxu0 0.0
        %1057 = vmatpush2.msra.mxu0 0.0
        %1058 = vmatprep.subr.mxu0 0.0
        %1059 = vmatpush2.msra.mxu0 0.0
        %1060 = vmatprep.mubr.f32.mxu0 0.0
        %1061 = vmatmul.mubr.f32.gmra.mxu0 %v994
        %v1062 = vpop.f32.mrf.mxu0
        %v1063 = vadd.f32 0.0, %v1062
        %v1064 = vpop.f32.mrf.mxu0
        %1065 = vdwg.mxu0
        %v1066 = vmul.f32 %v1063, %v988
        %1067 = vrot.lane.b32.xlu0 %v589, 112
        %v1068 = vpop.permute.xlu0 %1067
        %1069 = vrot.lane.b32.xlu0 %v663, 112
        %v1070 = vpop.permute.xlu0 %1069
        %v1071 = vsel %vm740, %v1068, 0
        %v1073 = vsel %vm740, %v1070, 0
        %1075 = vmatprep.subr.mxu0 0.0
        %1076 = vmatpush1.xpose.msra.mxu0 0.0
        %1077 = vmatprep.subr.mxu0 0.0
        %1078 = vmatpush1.xpose.msra.mxu0 0.0
        %1079 = vmatprep.subr.mxu0 0.0
        %1080 = vmatpush1.xpose.msra.mxu0 0.0
        %1081 = vmatprep.subr.mxu0 0.0
        %1082 = vmatpush1.xpose.msra.mxu0 0.0
        %1083 = vmatprep.subr.mxu0 0.0
        %1084 = vmatpush1.xpose.msra.mxu0 0.0
        %1085 = vmatprep.subr.mxu0 0.0
        %1086 = vmatpush1.xpose.msra.mxu0 0.0
        %1087 = vmatprep.subr.mxu0 0.0
        %1088 = vmatpush1.xpose.msra.mxu0 0.0
        %1089 = vmatprep.subr.mxu0 0.0
        %1090 = vmatpush1.xpose.msra.mxu0 0.0
        %1091 = vmatprep.subr.mxu0 0.0
        %1092 = vmatpush1.xpose.msra.mxu0 0.0
        %1093 = vmatprep.subr.mxu0 0.0
        %1094 = vmatpush1.xpose.msra.mxu0 0.0
        %1095 = vmatprep.subr.mxu0 0.0
        %1096 = vmatpush1.xpose.msra.mxu0 0.0
        %1097 = vmatprep.subr.mxu0 0.0
        %1098 = vmatpush1.xpose.msra.mxu0 0.0
        %1099 = vmatprep.subr.mxu0 0.0
        %1100 = vmatpush1.xpose.msra.mxu0 0.0
        %1101 = vmatprep.subr.mxu0 0.0
        %1102 = vmatpush1.xpose.msra.mxu0 0.0
        %1103 = vmatprep.subr.mxu0 0.0
        %1104 = vmatpush1.xpose.msra.mxu0 0.0
        %1105 = vmatprep.subr.mxu0 0.0
        %1106 = vmatpush1.xpose.msra.mxu0 %v1073
        %1107 = vmatprep.subr.mxu0 0.0
        %1108 = vmatpush2.xpose.msra.mxu0 0.0
        %1109 = vmatprep.subr.mxu0 0.0
        %1110 = vmatpush2.xpose.msra.mxu0 0.0
        %1111 = vmatprep.subr.mxu0 0.0
        %1112 = vmatpush2.xpose.msra.mxu0 0.0
        %1113 = vmatprep.subr.mxu0 0.0
        %1114 = vmatpush2.xpose.msra.mxu0 0.0
        %1115 = vmatprep.subr.mxu0 0.0
        %1116 = vmatpush2.xpose.msra.mxu0 0.0
        %1117 = vmatprep.subr.mxu0 0.0
        %1118 = vmatpush2.xpose.msra.mxu0 0.0
        %1119 = vmatprep.subr.mxu0 0.0
        %1120 = vmatpush2.xpose.msra.mxu0 0.0
        %1121 = vmatprep.subr.mxu0 0.0
        %1122 = vmatpush2.xpose.msra.mxu0 0.0
        %1123 = vmatprep.subr.mxu0 0.0
        %1124 = vmatpush2.xpose.msra.mxu0 0.0
        %1125 = vmatprep.subr.mxu0 0.0
        %1126 = vmatpush2.xpose.msra.mxu0 0.0
        %1127 = vmatprep.subr.mxu0 0.0
        %1128 = vmatpush2.xpose.msra.mxu0 0.0
        %1129 = vmatprep.subr.mxu0 0.0
        %1130 = vmatpush2.xpose.msra.mxu0 0.0
        %1131 = vmatprep.subr.mxu0 0.0
        %1132 = vmatpush2.xpose.msra.mxu0 0.0
        %1133 = vmatprep.subr.mxu0 0.0
        %1134 = vmatpush2.xpose.msra.mxu0 0.0
        %1135 = vmatprep.subr.mxu0 0.0
        %1136 = vmatpush2.xpose.msra.mxu0 0.0
        %1137 = vmatprep.subr.mxu0 0.0
        %1138 = vmatpush2.xpose.msra.mxu0 0.0
        %1139 = vmatprep.mubr.f32.mxu0 0.0
        %1140 = vmatmul.mubr.f32.gmra.mxu0 %v1071
        %v1141 = vpop.f32.mrf.mxu0
        %v1142 = vadd.f32 0.0, %v1141
        %v1143 = vpop.f32.mrf.mxu0
        %1144 = vdwg.mxu0
        %v1145 = vsel %vm740, %v1142, -inf
        %1146 = vmax.xlane.f32.xlu0 %v1145
        %v1147 = vpop.xlane.xlu0 %1146
        %v1148 = vsub.f32 %v1142, %v1147
        %v1149 = vmul.f32 %v1148, 1.442695
        %v1150 = vpow.pop %v1149
        %v1151 = vsel %vm740, %v1150, 0.0
        %1152 = vadd.xlane.f32.xlu0 %v1151
        %v1153 = vpop.xlane.xlu0 %1152
        %v1154 = vrcp.pop %v1153
        %1155 = vrot.lane.b32.xlu0 %v737, 112
        %v1156 = vpop.permute.xlu0 %1155
        %v1159 = vsel %vm740, %v1150, 0
        %1161 = vmatprep.subr.mxu0 0.0
        %1162 = vmatpush1.msra.mxu0 0.0
        %1163 = vmatprep.subr.mxu0 0.0
        %1164 = vmatpush1.msra.mxu0 0.0
        %1165 = vmatprep.subr.mxu0 0.0
        %1166 = vmatpush1.msra.mxu0 0.0
        %1167 = vmatprep.subr.mxu0 0.0
        %1168 = vmatpush1.msra.mxu0 0.0
        %1169 = vmatprep.subr.mxu0 0.0
        %1170 = vmatpush1.msra.mxu0 0.0
        %1171 = vmatprep.subr.mxu0 0.0
        %1172 = vmatpush1.msra.mxu0 0.0
        %1173 = vmatprep.subr.mxu0 0.0
        %1174 = vmatpush1.msra.mxu0 0.0
        %1175 = vmatprep.subr.mxu0 0.0
        %1176 = vmatpush1.msra.mxu0 0.0
        %1177 = vmatprep.subr.mxu0 0.0
        %1178 = vmatpush1.msra.mxu0 0.0
        %1179 = vmatprep.subr.mxu0 0.0
        %1180 = vmatpush1.msra.mxu0 0.0
        %1181 = vmatprep.subr.mxu0 0.0
        %1182 = vmatpush1.msra.mxu0 0.0
        %1183 = vmatprep.subr.mxu0 0.0
        %1184 = vmatpush1.msra.mxu0 0.0
        %1185 = vmatprep.subr.mxu0 0.0
        %1186 = vmatpush1.msra.mxu0 0.0
        %1187 = vmatprep.subr.mxu0 0.0
        %1188 = vmatpush1.msra.mxu0 0.0
        %1189 = vmatprep.subr.mxu0 0.0
        %1190 = vmatpush1.msra.mxu0 0.0
        %1191 = vmatprep.subr.mxu0 0.0
        %1192 = vmatpush1.msra.mxu0 %v1156
        %1193 = vmatprep.subr.mxu0 0.0
        %1194 = vmatpush2.msra.mxu0 0.0
        %1195 = vmatprep.subr.mxu0 0.0
        %1196 = vmatpush2.msra.mxu0 0.0
        %1197 = vmatprep.subr.mxu0 0.0
        %1198 = vmatpush2.msra.mxu0 0.0
        %1199 = vmatprep.subr.mxu0 0.0
        %1200 = vmatpush2.msra.mxu0 0.0
        %1201 = vmatprep.subr.mxu0 0.0
        %1202 = vmatpush2.msra.mxu0 0.0
        %1203 = vmatprep.subr.mxu0 0.0
        %1204 = vmatpush2.msra.mxu0 0.0
        %1205 = vmatprep.subr.mxu0 0.0
        %1206 = vmatpush2.msra.mxu0 0.0
        %1207 = vmatprep.subr.mxu0 0.0
        %1208 = vmatpush2.msra.mxu0 0.0
        %1209 = vmatprep.subr.mxu0 0.0
        %1210 = vmatpush2.msra.mxu0 0.0
        %1211 = vmatprep.subr.mxu0 0.0
        %1212 = vmatpush2.msra.mxu0 0.0
        %1213 = vmatprep.subr.mxu0 0.0
        %1214 = vmatpush2.msra.mxu0 0.0
        %1215 = vmatprep.subr.mxu0 0.0
        %1216 = vmatpush2.msra.mxu0 0.0
        %1217 = vmatprep.subr.mxu0 0.0
        %1218 = vmatpush2.msra.mxu0 0.0
        %1219 = vmatprep.subr.mxu0 0.0
        %1220 = vmatpush2.msra.mxu0 0.0
        %1221 = vmatprep.subr.mxu0 0.0
        %1222 = vmatpush2.msra.mxu0 0.0
        %1223 = vmatprep.subr.mxu0 0.0
        %1224 = vmatpush2.msra.mxu0 0.0
        %1225 = vmatprep.mubr.f32.mxu0 0.0
        %1226 = vmatmul.mubr.f32.gmra.mxu0 %v1159
        %v1227 = vpop.f32.mrf.mxu0
        %v1228 = vadd.f32 0.0, %v1227
        %v1229 = vpop.f32.mrf.mxu0
        %1230 = vdwg.mxu0
        %v1231 = vmul.f32 %v1228, %v1154
        %1232 = vrot.lane.b32.xlu0 %v589, 104
        %v1233 = vpop.permute.xlu0 %1232
        %1234 = vrot.lane.b32.xlu0 %v663, 104
        %v1235 = vpop.permute.xlu0 %1234
        %v1236 = vsel %vm740, %v1233, 0
        %v1238 = vsel %vm740, %v1235, 0
        %1240 = vmatprep.subr.mxu0 0.0
        %1241 = vmatpush1.xpose.msra.mxu0 0.0
        %1242 = vmatprep.subr.mxu0 0.0
        %1243 = vmatpush1.xpose.msra.mxu0 0.0
        %1244 = vmatprep.subr.mxu0 0.0
        %1245 = vmatpush1.xpose.msra.mxu0 0.0
        %1246 = vmatprep.subr.mxu0 0.0
        %1247 = vmatpush1.xpose.msra.mxu0 0.0
        %1248 = vmatprep.subr.mxu0 0.0
        %1249 = vmatpush1.xpose.msra.mxu0 0.0
        %1250 = vmatprep.subr.mxu0 0.0
        %1251 = vmatpush1.xpose.msra.mxu0 0.0
        %1252 = vmatprep.subr.mxu0 0.0
        %1253 = vmatpush1.xpose.msra.mxu0 0.0
        %1254 = vmatprep.subr.mxu0 0.0
        %1255 = vmatpush1.xpose.msra.mxu0 0.0
        %1256 = vmatprep.subr.mxu0 0.0
        %1257 = vmatpush1.xpose.msra.mxu0 0.0
        %1258 = vmatprep.subr.mxu0 0.0
        %1259 = vmatpush1.xpose.msra.mxu0 0.0
        %1260 = vmatprep.subr.mxu0 0.0
        %1261 = vmatpush1.xpose.msra.mxu0 0.0
        %1262 = vmatprep.subr.mxu0 0.0
        %1263 = vmatpush1.xpose.msra.mxu0 0.0
        %1264 = vmatprep.subr.mxu0 0.0
        %1265 = vmatpush1.xpose.msra.mxu0 0.0
        %1266 = vmatprep.subr.mxu0 0.0
        %1267 = vmatpush1.xpose.msra.mxu0 0.0
        %1268 = vmatprep.subr.mxu0 0.0
        %1269 = vmatpush1.xpose.msra.mxu0 0.0
        %1270 = vmatprep.subr.mxu0 0.0
        %1271 = vmatpush1.xpose.msra.mxu0 %v1238
        %1272 = vmatprep.subr.mxu0 0.0
        %1273 = vmatpush2.xpose.msra.mxu0 0.0
        %1274 = vmatprep.subr.mxu0 0.0
        %1275 = vmatpush2.xpose.msra.mxu0 0.0
        %1276 = vmatprep.subr.mxu0 0.0
        %1277 = vmatpush2.xpose.msra.mxu0 0.0
        %1278 = vmatprep.subr.mxu0 0.0
        %1279 = vmatpush2.xpose.msra.mxu0 0.0
        %1280 = vmatprep.subr.mxu0 0.0
        %1281 = vmatpush2.xpose.msra.mxu0 0.0
        %1282 = vmatprep.subr.mxu0 0.0
        %1283 = vmatpush2.xpose.msra.mxu0 0.0
        %1284 = vmatprep.subr.mxu0 0.0
        %1285 = vmatpush2.xpose.msra.mxu0 0.0
        %1286 = vmatprep.subr.mxu0 0.0
        %1287 = vmatpush2.xpose.msra.mxu0 0.0
        %1288 = vmatprep.subr.mxu0 0.0
        %1289 = vmatpush2.xpose.msra.mxu0 0.0
        %1290 = vmatprep.subr.mxu0 0.0
        %1291 = vmatpush2.xpose.msra.mxu0 0.0
        %1292 = vmatprep.subr.mxu0 0.0
        %1293 = vmatpush2.xpose.msra.mxu0 0.0
        %1294 = vmatprep.subr.mxu0 0.0
        %1295 = vmatpush2.xpose.msra.mxu0 0.0
        %1296 = vmatprep.subr.mxu0 0.0
        %1297 = vmatpush2.xpose.msra.mxu0 0.0
        %1298 = vmatprep.subr.mxu0 0.0
        %1299 = vmatpush2.xpose.msra.mxu0 0.0
        %1300 = vmatprep.subr.mxu0 0.0
        %1301 = vmatpush2.xpose.msra.mxu0 0.0
        %1302 = vmatprep.subr.mxu0 0.0
        %1303 = vmatpush2.xpose.msra.mxu0 0.0
        %1304 = vmatprep.mubr.f32.mxu0 0.0
        %1305 = vmatmul.mubr.f32.gmra.mxu0 %v1236
        %v1306 = vpop.f32.mrf.mxu0
        %v1307 = vadd.f32 0.0, %v1306
        %v1308 = vpop.f32.mrf.mxu0
        %1309 = vdwg.mxu0
        %v1310 = vsel %vm740, %v1307, -inf
        %1311 = vmax.xlane.f32.xlu0 %v1310
        %v1312 = vpop.xlane.xlu0 %1311
        %v1313 = vsub.f32 %v1307, %v1312
        %v1314 = vmul.f32 %v1313, 1.442695
        %v1315 = vpow.pop %v1314
        %v1316 = vsel %vm740, %v1315, 0.0
        %1317 = vadd.xlane.f32.xlu0 %v1316
        %v1318 = vpop.xlane.xlu0 %1317
        %v1319 = vrcp.pop %v1318
        %1320 = vrot.lane.b32.xlu0 %v737, 104
        %v1321 = vpop.permute.xlu0 %1320
        %v1324 = vsel %vm740, %v1315, 0
        %1326 = vmatprep.subr.mxu0 0.0
        %1327 = vmatpush1.msra.mxu0 0.0
        %1328 = vmatprep.subr.mxu0 0.0
        %1329 = vmatpush1.msra.mxu0 0.0
        %1330 = vmatprep.subr.mxu0 0.0
        %1331 = vmatpush1.msra.mxu0 0.0
        %1332 = vmatprep.subr.mxu0 0.0
        %1333 = vmatpush1.msra.mxu0 0.0
        %1334 = vmatprep.subr.mxu0 0.0
        %1335 = vmatpush1.msra.mxu0 0.0
        %1336 = vmatprep.subr.mxu0 0.0
        %1337 = vmatpush1.msra.mxu0 0.0
        %1338 = vmatprep.subr.mxu0 0.0
        %1339 = vmatpush1.msra.mxu0 0.0
        %1340 = vmatprep.subr.mxu0 0.0
        %1341 = vmatpush1.msra.mxu0 0.0
        %1342 = vmatprep.subr.mxu0 0.0
        %1343 = vmatpush1.msra.mxu0 0.0
        %1344 = vmatprep.subr.mxu0 0.0
        %1345 = vmatpush1.msra.mxu0 0.0
        %1346 = vmatprep.subr.mxu0 0.0
        %1347 = vmatpush1.msra.mxu0 0.0
        %1348 = vmatprep.subr.mxu0 0.0
        %1349 = vmatpush1.msra.mxu0 0.0
        %1350 = vmatprep.subr.mxu0 0.0
        %1351 = vmatpush1.msra.mxu0 0.0
        %1352 = vmatprep.subr.mxu0 0.0
        %1353 = vmatpush1.msra.mxu0 0.0
        %1354 = vmatprep.subr.mxu0 0.0
        %1355 = vmatpush1.msra.mxu0 0.0
        %1356 = vmatprep.subr.mxu0 0.0
        %1357 = vmatpush1.msra.mxu0 %v1321
        %1358 = vmatprep.subr.mxu0 0.0
        %1359 = vmatpush2.msra.mxu0 0.0
        %1360 = vmatprep.subr.mxu0 0.0
        %1361 = vmatpush2.msra.mxu0 0.0
        %1362 = vmatprep.subr.mxu0 0.0
        %1363 = vmatpush2.msra.mxu0 0.0
        %1364 = vmatprep.subr.mxu0 0.0
        %1365 = vmatpush2.msra.mxu0 0.0
        %1366 = vmatprep.subr.mxu0 0.0
        %1367 = vmatpush2.msra.mxu0 0.0
        %1368 = vmatprep.subr.mxu0 0.0
        %1369 = vmatpush2.msra.mxu0 0.0
        %1370 = vmatprep.subr.mxu0 0.0
        %1371 = vmatpush2.msra.mxu0 0.0
        %1372 = vmatprep.subr.mxu0 0.0
        %1373 = vmatpush2.msra.mxu0 0.0
        %1374 = vmatprep.subr.mxu0 0.0
        %1375 = vmatpush2.msra.mxu0 0.0
        %1376 = vmatprep.subr.mxu0 0.0
        %1377 = vmatpush2.msra.mxu0 0.0
        %1378 = vmatprep.subr.mxu0 0.0
        %1379 = vmatpush2.msra.mxu0 0.0
        %1380 = vmatprep.subr.mxu0 0.0
        %1381 = vmatpush2.msra.mxu0 0.0
        %1382 = vmatprep.subr.mxu0 0.0
        %1383 = vmatpush2.msra.mxu0 0.0
        %1384 = vmatprep.subr.mxu0 0.0
        %1385 = vmatpush2.msra.mxu0 0.0
        %1386 = vmatprep.subr.mxu0 0.0
        %1387 = vmatpush2.msra.mxu0 0.0
        %1388 = vmatprep.subr.mxu0 0.0
        %1389 = vmatpush2.msra.mxu0 0.0
        %1390 = vmatprep.mubr.f32.mxu0 0.0
        %1391 = vmatmul.mubr.f32.gmra.mxu0 %v1324
        %v1392 = vpop.f32.mrf.mxu0
        %v1393 = vadd.f32 0.0, %v1392
        %v1394 = vpop.f32.mrf.mxu0
        %1395 = vdwg.mxu0
        %v1396 = vmul.f32 %v1393, %v1319
        %1398 = vrot.lane.b32.xlu0 %v1066, 8
        %v1399 = vpop.permute.xlu0 %1398
        %1402 = vrot.lane.b32.xlu0 %v1231, 16
        %v1403 = vpop.permute.xlu0 %1402
        %1406 = vrot.lane.b32.xlu0 %v1396, 24
        %v1407 = vpop.permute.xlu0 %1406
        %v1409 = vsel %vm740, %v900, %v1399
        %vm1410 = vcmask 130048
        %v1411 = vsel %vm1410, %v1409, %v1403
        %vm1412 = vcmask 195584
        %v1413 = vsel %vm1412, %v1411, %v1407
        %v1414 = vld [vmem:[%s6] sm:$0xff]
        %v1415 = vld [vmem:[%s6 + $0x8] sm:$0xff]
        %v1416 = vld [vmem:[%s6 + $0x10] sm:$0xff]
        %v1417 = vld [vmem:[%s6 + $0x18] sm:$0xff]
        %v1418 = vld [vmem:[%s7] sm:$0x1]
        %v1420 = vlaneseq
        %v1421 = vshrl.u32 %v1420, 7
        %v1422 = vsub.s32 0, %v1421
        %v1423 = vrot.slane %v1418, %v1422
        %v1426 = vsel %vm486, %v1413, 0
        %1428 = vmatprep.subr.mxu0 0.0
        %1429 = vmatpush1.msra.mxu0 0.0
        %1430 = vmatprep.subr.mxu0 0.0
        %1431 = vmatpush1.msra.mxu0 0.0
        %1432 = vmatprep.subr.mxu0 0.0
        %1433 = vmatpush1.msra.mxu0 0.0
        %1434 = vmatprep.subr.mxu0 0.0
        %1435 = vmatpush1.msra.mxu0 0.0
        %1436 = vmatprep.subr.mxu0 0.0
        %1437 = vmatpush1.msra.mxu0 0.0
        %1438 = vmatprep.subr.mxu0 0.0
        %1439 = vmatpush1.msra.mxu0 0.0
        %1440 = vmatprep.subr.mxu0 0.0
        %1441 = vmatpush1.msra.mxu0 0.0
        %1442 = vmatprep.subr.mxu0 0.0
        %1443 = vmatpush1.msra.mxu0 0.0
        %1444 = vmatprep.subr.mxu0 0.0
        %1445 = vmatpush1.msra.mxu0 0.0
        %1446 = vmatprep.subr.mxu0 0.0
        %1447 = vmatpush1.msra.mxu0 0.0
        %1448 = vmatprep.subr.mxu0 0.0
        %1449 = vmatpush1.msra.mxu0 0.0
        %1450 = vmatprep.subr.mxu0 0.0
        %1451 = vmatpush1.msra.mxu0 0.0
        %1452 = vmatprep.subr.mxu0 0.0
        %1453 = vmatpush1.msra.mxu0 %v1417
        %1454 = vmatprep.subr.mxu0 0.0
        %1455 = vmatpush1.msra.mxu0 %v1416
        %1456 = vmatprep.subr.mxu0 0.0
        %1457 = vmatpush1.msra.mxu0 %v1415
        %1458 = vmatprep.subr.mxu0 0.0
        %1459 = vmatpush1.msra.mxu0 %v1414
        %1460 = vmatprep.subr.mxu0 0.0
        %1461 = vmatpush2.msra.mxu0 0.0
        %1462 = vmatprep.subr.mxu0 0.0
        %1463 = vmatpush2.msra.mxu0 0.0
        %1464 = vmatprep.subr.mxu0 0.0
        %1465 = vmatpush2.msra.mxu0 0.0
        %1466 = vmatprep.subr.mxu0 0.0
        %1467 = vmatpush2.msra.mxu0 0.0
        %1468 = vmatprep.subr.mxu0 0.0
        %1469 = vmatpush2.msra.mxu0 0.0
        %1470 = vmatprep.subr.mxu0 0.0
        %1471 = vmatpush2.msra.mxu0 0.0
        %1472 = vmatprep.subr.mxu0 0.0
        %1473 = vmatpush2.msra.mxu0 0.0
        %1474 = vmatprep.subr.mxu0 0.0
        %1475 = vmatpush2.msra.mxu0 0.0
        %1476 = vmatprep.subr.mxu0 0.0
        %1477 = vmatpush2.msra.mxu0 0.0
        %1478 = vmatprep.subr.mxu0 0.0
        %1479 = vmatpush2.msra.mxu0 0.0
        %1480 = vmatprep.subr.mxu0 0.0
        %1481 = vmatpush2.msra.mxu0 0.0
        %1482 = vmatprep.subr.mxu0 0.0
        %1483 = vmatpush2.msra.mxu0 0.0
        %1484 = vmatprep.subr.mxu0 0.0
        %1485 = vmatpush2.msra.mxu0 0.0
        %1486 = vmatprep.subr.mxu0 0.0
        %1487 = vmatpush2.msra.mxu0 0.0
        %1488 = vmatprep.subr.mxu0 0.0
        %1489 = vmatpush2.msra.mxu0 0.0
        %1490 = vmatprep.subr.mxu0 0.0
        %1491 = vmatpush2.msra.mxu0 0.0
        %1492 = vmatprep.mubr.f32.mxu0 0.0
        %1493 = vmatmul.mubr.f32.gmra.mxu0 %v1426
        %v1494 = vpop.f32.mrf.mxu0
        %v1495 = vadd.f32 %v1423, %v1494
        %v1496 = vpop.f32.mrf.mxu0
        %1497 = vdwg.mxu0
        %v1498 = vadd.f32 %v483, %v1495
        %v1499 = vld [vmem:[%s8] sm:$0x1]
        %v1500 = vld [vmem:[%s9] sm:$0x1]
        %v1501 = vsel %vm486, %v1498, 0.0
        %1502 = vadd.xlane.f32.xlu0 %v1501
        %v1503 = vpop.xlane.xlu0 %1502
        %v1504 = vmul.f32 %v1503, %v490
        %v1505 = vsub.f32 %v1498, %v1504
        %v1506 = vmul.f32 %v1505, %v1505
        %v1507 = vsel %vm486, %v1506, 0.0
        %1508 = vadd.xlane.f32.xlu0 %v1507
        %v1509 = vpop.xlane.xlu0 %1508
        %v1510 = vmul.f32 %v1509, %v490
        %v1511 = vadd.f32 %v1510, 1e-05
        %v1512 = vrsqrt.pop %v1511
        %v1513 = vmul.f32 %v1505, %v1512
        %v1515 = vlaneseq
        %v1516 = vshrl.u32 %v1515, 7
        %v1517 = vsub.s32 0, %v1516
        %v1518 = vrot.slane %v1499, %v1517
        %v1520 = vmul.f32 %v1513, %v1518
        %v1522 = vlaneseq
        %v1523 = vshrl.u32 %v1522, 7
        %v1524 = vsub.s32 0, %v1523
        %v1525 = vrot.slane %v1500, %v1524
        %v1527 = vadd.f32 %v1520, %v1525
        %v1528 = vld [vmem:[%s10] sm:$0xff]
        %v1529 = vld [vmem:[%s10 + $0x8] sm:$0xff]
        %v1530 = vld [vmem:[%s10 + $0x10] sm:$0xff]
        %v1531 = vld [vmem:[%s10 + $0x18] sm:$0xff]
        %v1532 = vld [vmem:[%s11] sm:$0x1]
        %v1534 = vlaneseq
        %v1535 = vshrl.u32 %v1534, 7
        %v1536 = vsub.s32 0, %v1535
        %v1537 = vrot.slane %v1532, %v1536
        %v1540 = vsel %vm486, %v1527, 0
        %1542 = vmatprep.subr.mxu0 0.0
        %1543 = vmatpush1.msra.mxu0 0.0
        %1544 = vmatprep.subr.mxu0 0.0
        %1545 = vmatpush1.msra.mxu0 0.0
        %1546 = vmatprep.subr.mxu0 0.0
        %1547 = vmatpush1.msra.mxu0 0.0
        %1548 = vmatprep.subr.mxu0 0.0
        %1549 = vmatpush1.msra.mxu0 0.0
        %1550 = vmatprep.subr.mxu0 0.0
        %1551 = vmatpush1.msra.mxu0 0.0
        %1552 = vmatprep.subr.mxu0 0.0
        %1553 = vmatpush1.msra.mxu0 0.0
        %1554 = vmatprep.subr.mxu0 0.0
        %1555 = vmatpush1.msra.mxu0 0.0
        %1556 = vmatprep.subr.mxu0 0.0
        %1557 = vmatpush1.msra.mxu0 0.0
        %1558 = vmatprep.subr.mxu0 0.0
        %1559 = vmatpush1.msra.mxu0 0.0
        %1560 = vmatprep.subr.mxu0 0.0
        %1561 = vmatpush1.msra.mxu0 0.0
        %1562 = vmatprep.subr.mxu0 0.0
        %1563 = vmatpush1.msra.mxu0 0.0
        %1564 = vmatprep.subr.mxu0 0.0
        %1565 = vmatpush1.msra.mxu0 0.0
        %1566 = vmatprep.subr.mxu0 0.0
        %1567 = vmatpush1.msra.mxu0 %v1531
        %1568 = vmatprep.subr.mxu0 0.0
        %1569 = vmatpush1.msra.mxu0 %v1530
        %1570 = vmatprep.subr.mxu0 0.0
        %1571 = vmatpush1.msra.mxu0 %v1529
        %1572 = vmatprep.subr.mxu0 0.0
        %1573 = vmatpush1.msra.mxu0 %v1528
        %1574 = vmatprep.subr.mxu0 0.0
        %1575 = vmatpush2.msra.mxu0 0.0
        %1576 = vmatprep.subr.mxu0 0.0
        %1577 = vmatpush2.msra.mxu0 0.0
        %1578 = vmatprep.subr.mxu0 0.0
        %1579 = vmatpush2.msra.mxu0 0.0
        %1580 = vmatprep.subr.mxu0 0.0
        %1581 = vmatpush2.msra.mxu0 0.0
        %1582 = vmatprep.subr.mxu0 0.0
        %1583 = vmatpush2.msra.mxu0 0.0
        %1584 = vmatprep.subr.mxu0 0.0
        %1585 = vmatpush2.msra.mxu0 0.0
        %1586 = vmatprep.subr.mxu0 0.0
        %1587 = vmatpush2.msra.mxu0 0.0
        %1588 = vmatprep.subr.mxu0 0.0
        %1589 = vmatpush2.msra.mxu0 0.0
        %1590 = vmatprep.subr.mxu0 0.0
        %1591 = vmatpush2.msra.mxu0 0.0
        %1592 = vmatprep.subr.mxu0 0.0
        %1593 = vmatpush2.msra.mxu0 0.0
        %1594 = vmatprep.subr.mxu0 0.0
        %1595 = vmatpush2.msra.mxu0 0.0
        %1596 = vmatprep.subr.mxu0 0.0
        %1597 = vmatpush2.msra.mxu0 0.0
        %1598 = vmatprep.subr.mxu0 0.0
        %1599 = vmatpush2.msra.mxu0 0.0
        %1600 = vmatprep.subr.mxu0 0.0
        %1601 = vmatpush2.msra.mxu0 0.0
        %1602 = vmatprep.subr.mxu0 0.0
        %1603 = vmatpush2.msra.mxu0 0.0
        %1604 = vmatprep.subr.mxu0 0.0
        %1605 = vmatpush2.msra.mxu0 0.0
        %1606 = vmatprep.mubr.f32.mxu0 0.0
        %1607 = vmatmul.mubr.f32.gmra.mxu0 %v1540
        %v1608 = vpop.f32.mrf.mxu0
        %v1609 = vadd.f32 %v1537, %v1608
        %v1610 = vpop.f32.mrf.mxu0
        %1611 = vdwg.mxu0
        %v1612 = vmul.f32 %v1609, 0.5
        %v1613 = vrcp.pop 1.4142135
        %v1614 = vmul.f32 %v1609, %v1613
        %v1615 = verf.f32.pop %v1614
        %v1616 = vadd.f32 %v1615, 1.0
        %v1617 = vmul.f32 %v1612, %v1616
        %v1618 = vld [vmem:[%s12] sm:$0xff]
        %v1619 = vld [vmem:[%s12 + $0x8] sm:$0xff]
        %v1620 = vld [vmem:[%s12 + $0x10] sm:$0xff]
        %v1621 = vld [vmem:[%s12 + $0x18] sm:$0xff]
        %v1622 = vld [vmem:[%s12 + $0x20] sm:$0xff]
        %v1623 = vld [vmem:[%s12 + $0x28] sm:$0xff]
        %v1624 = vld [vmem:[%s12 + $0x30] sm:$0xff]
        %v1625 = vld [vmem:[%s12 + $0x38] sm:$0xff]
        %v1626 = vld [vmem:[%s12 + $0x40] sm:$0xff]
        %v1627 = vld [vmem:[%s12 + $0x48] sm:$0xff]
        %v1628 = vld [vmem:[%s12 + $0x50] sm:$0xff]
        %v1629 = vld [vmem:[%s12 + $0x58] sm:$0xff]
        %v1630 = vld [vmem:[%s12 + $0x60] sm:$0xff]
        %v1631 = vld [vmem:[%s12 + $0x68] sm:$0xff]
        %v1632 = vld [vmem:[%s12 + $0x70] sm:$0xff]
        %v1633 = vld [vmem:[%s12 + $0x78] sm:$0xff]
        %v1634 = vld [vmem:[%s13] sm:$0x1]
        %v1636 = vlaneseq
        %v1637 = vshrl.u32 %v1636, 7
        %v1638 = vsub.s32 0, %v1637
        %v1639 = vrot.slane %v1634, %v1638
        %1641 = vmatprep.subr.mxu0 0.0
        %1642 = vmatpush1.msra.mxu0 %v1633
        %1643 = vmatprep.subr.mxu0 0.0
        %1644 = vmatpush1.msra.mxu0 %v1632
        %1645 = vmatprep.subr.mxu0 0.0
        %1646 = vmatpush1.msra.mxu0 %v1631
        %1647 = vmatprep.subr.mxu0 0.0
        %1648 = vmatpush1.msra.mxu0 %v1630
        %1649 = vmatprep.subr.mxu0 0.0
        %1650 = vmatpush1.msra.mxu0 %v1629
        %1651 = vmatprep.subr.mxu0 0.0
        %1652 = vmatpush1.msra.mxu0 %v1628
        %1653 = vmatprep.subr.mxu0 0.0
        %1654 = vmatpush1.msra.mxu0 %v1627
        %1655 = vmatprep.subr.mxu0 0.0
        %1656 = vmatpush1.msra.mxu0 %v1626
        %1657 = vmatprep.subr.mxu0 0.0
        %1658 = vmatpush1.msra.mxu0 %v1625
        %1659 = vmatprep.subr.mxu0 0.0
        %1660 = vmatpush1.msra.mxu0 %v1624
        %1661 = vmatprep.subr.mxu0 0.0
        %1662 = vmatpush1.msra.mxu0 %v1623
        %1663 = vmatprep.subr.mxu0 0.0
        %1664 = vmatpush1.msra.mxu0 %v1622
        %1665 = vmatprep.subr.mxu0 0.0
        %1666 = vmatpush1.msra.mxu0 %v1621
        %1667 = vmatprep.subr.mxu0 0.0
        %1668 = vmatpush1.msra.mxu0 %v1620
        %1669 = vmatprep.subr.mxu0 0.0
        %1670 = vmatpush1.msra.mxu0 %v1619
        %1671 = vmatprep.subr.mxu0 0.0
        %1672 = vmatpush1.msra.mxu0 %v1618
        %1673 = vmatprep.subr.mxu0 0.0
        %1674 = vmatpush2.msra.mxu0 0.0
        %1675 = vmatprep.subr.mxu0 0.0
        %1676 = vmatpush2.msra.mxu0 0.0
        %1677 = vmatprep.subr.mxu0 0.0
        %1678 = vmatpush2.msra.mxu0 0.0
        %1679 = vmatprep.subr.mxu0 0.0
        %1680 = vmatpush2.msra.mxu0 0.0
        %1681 = vmatprep.subr.mxu0 0.0
        %1682 = vmatpush2.msra.mxu0 0.0
        %1683 = vmatprep.subr.mxu0 0.0
        %1684 = vmatpush2.msra.mxu0 0.0
        %1685 = vmatprep.subr.mxu0 0.0
        %1686 = vmatpush2.msra.mxu0 0.0
        %1687 = vmatprep.subr.mxu0 0.0
        %1688 = vmatpush2.msra.mxu0 0.0
        %1689 = vmatprep.subr.mxu0 0.0
        %1690 = vmatpush2.msra.mxu0 0.0
        %1691 = vmatprep.subr.mxu0 0.0
        %1692 = vmatpush2.msra.mxu0 0.0
        %1693 = vmatprep.subr.mxu0 0.0
        %1694 = vmatpush2.msra.mxu0 0.0
        %1695 = vmatprep.subr.mxu0 0.0
        %1696 = vmatpush2.msra.mxu0 0.0
        %1697 = vmatprep.subr.mxu0 0.0
        %1698 = vmatpush2.msra.mxu0 0.0
        %1699 = vmatprep.subr.mxu0 0.0
        %1700 = vmatpush2.msra.mxu0 0.0
        %1701 = vmatprep.subr.mxu0 0.0
        %1702 = vmatpush2.msra.mxu0 0.0
        %1703 = vmatprep.subr.mxu0 0.0
        %1704 = vmatpush2.msra.mxu0 0.0
        %1705 = vmatprep.mubr.f32.mxu0 0.0
        %1706 = vmatmul.mubr.f32.gmra.mxu0 %v1617
        %v1707 = vpop.f32.mrf.mxu0
        %v1708 = vadd.f32 %v1639, %v1707
        %v1709 = vpop.f32.mrf.mxu0
        %1710 = vdwg.mxu0
        %v1711 = vadd.f32 %v1498, %v1708
        %1712 = vst.msk [vmem:[%s482] sm:$0xff] %vm486, %v1711
        %s1713 = sand.u32 %s338, 1
        %s1714 = scalar_lea.sflag [#allocation4], %s1713
        %s1715 = sand.u32 %s338, 1
        %s1716 = smul.addr %s1715, 8
        %s1717 = scalar_lea.vmem [#allocation5], %s1716
        // Predicated region
        $region81: #{tpu_custom_call.1} parent=75 // pred_check
          %p1718 = pneg %p348
        $region82: #{tpu_custom_call.1} parent=75 // pred_check_branch
          %1720 = sbr.rel (%p1718) target = $region84
        $region83: #{tpu_custom_call.1} parent=75 // pred_region
          %s1722 = ssub.s32 128, 128
          %1723 = vsyncadd %s1714, %s1722
          %s1724 = smul.addr %s31, 128
          %s1725 = scalar_lea.hbm %s14, %s1724
          %s1727 = sshll.u32 %s1717, 4
          %s1728 = int_to_ptr.vmem [resolvable:$true] %s1727
          %1730 = dma.vmem_to_hbm [thread:$0]  %s1728, 128, %s1725, %s1714
        $region84: #{tpu_custom_call.1} parent=75 // pred_fallthru
          _
      $region76: #{tpu_custom_call.1} parent=5 // pred_fallthru
        _
      %p1731 = scmp.le.s32.totalorder 2, %s26
      // Predicated region
      $region85: #{tpu_custom_call.1} parent=5 // pred_check
        %p1732 = pneg %p1731
      $region86: #{tpu_custom_call.1} parent=5 // pred_check_branch
        %1734 = sbr.rel (%p1732) target = $region88
      $region87: #{tpu_custom_call.1} parent=5 // pred_region
        %s1735 = ssub.s32 %s26, 2
        // Predicated region
        $region89: #{tpu_custom_call.1} parent=87 // pred_check
          %p1736 = pneg %p354
        $region90: #{tpu_custom_call.1} parent=87 // pred_check_branch
          %1738 = sbr.rel (%p1736) target = $region92
        $region91: #{tpu_custom_call.1} parent=87 // pred_region
          %s1739 = sand.u32 %s339, 1
          %s1740 = scalar_lea.sflag [#allocation4], %s1739
          %s1741 = sand.u32 %s339, 1
          %s1742 = smul.addr %s1741, 8
          %s1743 = scalar_lea.vmem [#allocation5], %s1742
          %1744 = dma.done %s1740, 128
        $region92: #{tpu_custom_call.1} parent=87 // pred_fallthru
          _
      $region88: #{tpu_custom_call.1} parent=5 // pred_fallthru
        _
    $region6: #{tpu_custom_call.1} parent=1 // loop_footer
      %s30 = sadd.s32 1, %s26
    $region7: #{tpu_custom_call.1} parent=1 // loop_footer_branch
      %25 = sbr.rel target = $region3
    $region8: #{tpu_custom_call.1} parent=1 // loop_exit
      _
    %1745 = vsyncpa [#allocation3], 1
    %s1746 = scalar_lea.sflag [#allocation3], 1
    %1747 = vsyncpa %s1746, 1
    %1748 = vsyncpa [#allocation4], 1
    %s1749 = scalar_lea.sflag [#allocation4], 1
    %1750 = vsyncpa %s1749, 1

</llo_original>
